<compile_context>
chip_gen: v5e
topology: v5e:2x2
jax: 0.10.0
libtpu: 0.0.40
codegen_flags: <defaults>
</compile_context>

<pallas_src>
import jax
import jax.numpy as jnp
from jax import lax
from jax.experimental import pallas as pl
from jax.experimental.pallas import tpu as pltpu

LAYER_SIZES  = [784, 512, 256, 128, 64, 32, 10]        # PyTorch Net layer sizes
PADDED_SIZES = [784, 512, 256, 128, 128, 128, 128]     # lane-dense (tails padded to 128)
NUM_CLASSES  = 10
TB_TARGET    = 1024                                    # batch-tile rows per grid step (review #1)


def _round_up(x, m):
    return (x + m - 1) // m * m


def mlp_kernel(x_ref,
               w1, b1, w2, b2, w3, b3, w4, b4, w5, b5, w6, b6,
               out_ref):
    """One batch tile: 6 dense layers (MXU, f32 acc) + ReLU + masked log_softmax."""
    # Input arrives in f32 (no wrapper cast / extra HBM pass); cast to bf16 on the VPU here.
    h = x_ref[...].astype(jnp.bfloat16)                 # (TB, 784) bf16

    def dense_relu(h, w_ref, b_ref):
        z = jnp.dot(h, w_ref[...], preferred_element_type=jnp.float32) + b_ref[...]
        return jnp.maximum(z, 0.0).astype(jnp.bfloat16)

    h = dense_relu(h, w1, b1)                           # (TB, 512)
    h = dense_relu(h, w2, b2)                           # (TB, 256)
    h = dense_relu(h, w3, b3)                           # (TB, 128)
    h = dense_relu(h, w4, b4)                           # (TB, 128)  cols >= 64 are exact zeros
    h = dense_relu(h, w5, b5)                           # (TB, 128)  cols >= 32 are exact zeros

    logits = jnp.dot(h, w6[...], preferred_element_type=jnp.float32) + b6[...]   # (TB, 128) f32

    # Mask padded logit lanes so log_softmax over the 10 real classes is unchanged.
    col = lax.broadcasted_iota(jnp.int32, logits.shape, 1)
    logits = jnp.where(col < NUM_CLASSES, logits, jnp.float32(-1e30))

    # Numerically stable log_softmax along the class axis (f32), stored as bf16 (review #4).
    m = jnp.max(logits, axis=-1, keepdims=True)
    shifted = logits - m
    lse = jnp.log(jnp.sum(jnp.exp(shifted), axis=-1, keepdims=True))
    out_ref[...] = (shifted - lse).astype(out_ref.dtype)


def init_params(key):
    """PyTorch-Linear-style uniform init: U(-1/sqrt(fan_in), 1/sqrt(fan_in))."""
    params = []
    for i in range(len(LAYER_SIZES) - 1):
        fan_in, fan_out = LAYER_SIZES[i], LAYER_SIZES[i + 1]
        key, kw, kb = jax.random.split(key, 3)
        bound = 1.0 / (fan_in ** 0.5)
        # Stored as (in, out) so the kernel does h @ W  (== x @ W_torch.T).
        w = jax.random.uniform(kw, (fan_in, fan_out), jnp.float32, -bound, bound)
        b = jax.random.uniform(kb, (1, fan_out), jnp.float32, -bound, bound)
        params.append((w, b))
    return params


def _pack_params(params):
    """Zero-pad narrow layers to PADDED_SIZES (lane-dense); weights -> bf16, biases stay f32."""
    packed = []
    for i, (w, b) in enumerate(params):
        kin, kout = PADDED_SIZES[i], PADDED_SIZES[i + 1]
        wp = jnp.zeros((kin, kout), jnp.float32).at[:w.shape[0], :w.shape[1]].set(w)
        bp = jnp.zeros((1, kout), jnp.float32).at[:, :b.shape[1]].set(b)
        packed.extend([wp.astype(jnp.bfloat16), bp])
    return packed


def _pick_tile(B):
    """Static (trace-time) batch tiling: even #steps >= 2 for moderate/large B (review #2)."""
    if B > 256:
        n_steps = max(2, pl.cdiv(B, TB_TARGET))
        n_steps += n_steps % 2                       # even step count -> balanced on v7x's 2 TCs
        tb = _round_up(pl.cdiv(B, n_steps), 8)
    else:
        tb = _round_up(max(B, 1), 8)                 # single small tile; splitting buys nothing
    b_pad = _round_up(B, tb)
    return tb, b_pad, b_pad // tb


@jax.jit
def net_forward(x, params):
    """x: (B, 1, 28, 28) or anything flattenable to (B, 784). Returns (B, 10) f32 log-probs."""
    # x.view(-1, 784); keep f32 for the kernel input (cast to bf16 happens in-kernel).
    x2d = x.astype(jnp.float32).reshape(-1, LAYER_SIZES[0])
    B = x2d.shape[0]

    tb, b_pad, n_steps = _pick_tile(B)

    # Only materialize a padded copy when the batch isn't tile-aligned (review #3).
    x_p = x2d if b_pad == B else jnp.pad(x2d, ((0, b_pad - B), (0, 0)))

    flat_params = _pack_params(params)

    def resident(shape):
        # Same block every step -> stays VMEM-resident, no re-DMA across grid steps.
        return pl.BlockSpec(shape, lambda i: (0, 0))

    in_specs = [pl.BlockSpec((tb, LAYER_SIZES[0]), lambda i: (i, 0))]
    in_specs += [resident(p.shape) for p in flat_params]

    out_w = PADDED_SIZES[-1]                             # 128-wide lane-dense output

    flops = 2 * b_pad * sum(PADDED_SIZES[i] * PADDED_SIZES[i + 1]
                            for i in range(len(PADDED_SIZES) - 1))
    bytes_accessed = (sum(p.size * p.dtype.itemsize for p in flat_params)
                      + b_pad * LAYER_SIZES[0] * 4       # f32 input
                      + b_pad * out_w * 2)               # bf16 output

    out = pl.pallas_call(
        mlp_kernel,
        out_shape=jax.ShapeDtypeStruct((b_pad, out_w), jnp.bfloat16),   # review #4
        grid=(n_steps,),
        in_specs=in_specs,
        out_specs=pl.BlockSpec((tb, out_w), lambda i: (i, 0)),
        compiler_params=pltpu.CompilerParams(
            dimension_semantics=("parallel",),           # megacore split on v7x; no-op v5e/v6e
            vmem_limit_bytes=32 * 1024 * 1024,           # ~17 MiB actual at tb=1024 (review #6)
        ),
        cost_estimate=pl.CostEstimate(
            flops=flops,
            transcendentals=b_pad * (out_w + 1),
            bytes_accessed=bytes_accessed,
        ),
    )(x_p, *flat_params)

    return out[:B, :NUM_CLASSES].astype(jnp.float32)


def reference_forward(x, params):
    """Pure-JAX reference mirroring kernel numerics (bf16 params/acts, f32 accumulate)."""
    h = x.astype(jnp.float32).reshape(-1, LAYER_SIZES[0]).astype(jnp.bfloat16)
    z = None
    for i, (w, b) in enumerate(params):
        z = jnp.dot(h, w.astype(jnp.bfloat16), preferred_element_type=jnp.float32) + b
        if i < len(params) - 1:
            h = jnp.maximum(z, 0.0).astype(jnp.bfloat16)
    return jax.nn.log_softmax(z, axis=1)


if __name__ == "__main__":
    key = jax.random.PRNGKey(0)
    kparam, kx = jax.random.split(key)

    params = init_params(kparam)

    # Small MNIST-like batch: (B, C, H, W) = (8, 1, 28, 28)
    x = jax.random.normal(kx, (8, 1, 28, 28), dtype=jnp.float32)

    out = jax.block_until_ready(net_forward(x, params))
    ref = reference_forward(x, params)

    assert out.shape == (8, NUM_CLASSES), out.shape
    assert bool(jnp.all(jnp.isfinite(out))), "non-finite output"
    # Output is stored as bf16 in the kernel (review #4): ~3 significant digits, so use
    # a slightly looser tolerance than the f32 version (still tight for log-probs).
    assert jnp.allclose(out, ref, atol=2e-2, rtol=2e-2), (
        f"mismatch vs reference: max abs err {float(jnp.max(jnp.abs(out - ref)))}")

    print("KERNEL_OK")
</pallas_src>

<mosaic_0001>
module attributes {stable_mosaic.version = 11 : i64} {
  func.func @mlp_kernel(%arg0: i32, %arg1: memref<8x784xf32, #tpu.memory_space<vmem>>, %arg2: memref<784x512xbf16, #tpu.memory_space<vmem>>, %arg3: memref<1x512xf32, #tpu.memory_space<vmem>>, %arg4: memref<512x256xbf16, #tpu.memory_space<vmem>>, %arg5: memref<1x256xf32, #tpu.memory_space<vmem>>, %arg6: memref<256x128xbf16, #tpu.memory_space<vmem>>, %arg7: memref<1x128xf32, #tpu.memory_space<vmem>>, %arg8: memref<128x128xbf16, #tpu.memory_space<vmem>>, %arg9: memref<1x128xf32, #tpu.memory_space<vmem>>, %arg10: memref<128x128xbf16, #tpu.memory_space<vmem>>, %arg11: memref<1x128xf32, #tpu.memory_space<vmem>>, %arg12: memref<128x128xbf16, #tpu.memory_space<vmem>>, %arg13: memref<1x128xf32, #tpu.memory_space<vmem>>, %arg14: memref<8x128xbf16, #tpu.memory_space<vmem>>) attributes {dimension_semantics = [#tpu.dimension_semantics<parallel>], iteration_bounds = array<i64: 1>, scalar_prefetch = 0 : i64, scratch_operands = 0 : i64, tpu.core_type = #tpu.core_type<tc>, window_params = [{transform_indices = @transform_0, window_bounds = array<i64: 8, 784>}, {pipeline_mode = #tpu.pipeline_mode<synchronous>, transform_indices = @transform_1, window_bounds = array<i64: 784, 512>}, {pipeline_mode = #tpu.pipeline_mode<synchronous>, transform_indices = @transform_2, window_bounds = array<i64: 1, 512>}, {pipeline_mode = #tpu.pipeline_mode<synchronous>, transform_indices = @transform_3, window_bounds = array<i64: 512, 256>}, {pipeline_mode = #tpu.pipeline_mode<synchronous>, transform_indices = @transform_4, window_bounds = array<i64: 1, 256>}, {pipeline_mode = #tpu.pipeline_mode<synchronous>, transform_indices = @transform_5, window_bounds = array<i64: 256, 128>}, {pipeline_mode = #tpu.pipeline_mode<synchronous>, transform_indices = @transform_6, window_bounds = array<i64: 1, 128>}, {pipeline_mode = #tpu.pipeline_mode<synchronous>, transform_indices = @transform_7, window_bounds = array<i64: 128, 128>}, {pipeline_mode = #tpu.pipeline_mode<synchronous>, transform_indices = @transform_8, window_bounds = array<i64: 1, 128>}, {pipeline_mode = #tpu.pipeline_mode<synchronous>, transform_indices = @transform_9, window_bounds = array<i64: 128, 128>}, {pipeline_mode = #tpu.pipeline_mode<synchronous>, transform_indices = @transform_10, window_bounds = array<i64: 1, 128>}, {pipeline_mode = #tpu.pipeline_mode<synchronous>, transform_indices = @transform_11, window_bounds = array<i64: 128, 128>}, {pipeline_mode = #tpu.pipeline_mode<synchronous>, transform_indices = @transform_12, window_bounds = array<i64: 1, 128>}, {transform_indices = @transform_13, window_bounds = array<i64: 8, 128>}]} {
    %c0 = arith.constant 0 : index
    %c0_0 = arith.constant 0 : index
    %0 = vector.load %arg1[%c0, %c0_0] : memref<8x784xf32, #tpu.memory_space<vmem>>, vector<8x784xf32>
    %1 = arith.truncf %0 : vector<8x784xf32> to vector<8x784xbf16>
    %c0_1 = arith.constant 0 : index
    %c0_2 = arith.constant 0 : index
    %2 = vector.load %arg2[%c0_1, %c0_2] : memref<784x512xbf16, #tpu.memory_space<vmem>>, vector<784x512xbf16>
    %cst = arith.constant dense<0.000000e+00> : vector<8x512xf32>
    %3 = tpu.matmul %1, %2, %cst {dimension_numbers = #tpu.dot_dimension_numbers<[1], [0], [0], [1], [0, 0, 1, 1], [], []>} : vector<8x784xbf16>, vector<784x512xbf16>, vector<8x512xf32> -> vector<8x512xf32>
    %c0_3 = arith.constant 0 : index
    %c0_4 = arith.constant 0 : index
    %4 = vector.load %arg3[%c0_3, %c0_4] : memref<1x512xf32, #tpu.memory_space<vmem>>, vector<1x512xf32>
    %5 = vector.broadcast %4 : vector<1x512xf32> to vector<8x512xf32>
    %6 = arith.addf %3, %5 : vector<8x512xf32>
    %cst_5 = arith.constant 0.000000e+00 : f32
    %7 = vector.broadcast %cst_5 : f32 to vector<8x512xf32>
    %8 = arith.maximumf %6, %7 : vector<8x512xf32>
    %9 = arith.truncf %8 : vector<8x512xf32> to vector<8x512xbf16>
    %c0_6 = arith.constant 0 : index
    %c0_7 = arith.constant 0 : index
    %10 = vector.load %arg4[%c0_6, %c0_7] : memref<512x256xbf16, #tpu.memory_space<vmem>>, vector<512x256xbf16>
    %cst_8 = arith.constant dense<0.000000e+00> : vector<8x256xf32>
    %11 = tpu.matmul %9, %10, %cst_8 {dimension_numbers = #tpu.dot_dimension_numbers<[1], [0], [0], [1], [0, 0, 1, 1], [], []>} : vector<8x512xbf16>, vector<512x256xbf16>, vector<8x256xf32> -> vector<8x256xf32>
    %c0_9 = arith.constant 0 : index
    %c0_10 = arith.constant 0 : index
    %12 = vector.load %arg5[%c0_9, %c0_10] : memref<1x256xf32, #tpu.memory_space<vmem>>, vector<1x256xf32>
    %13 = vector.broadcast %12 : vector<1x256xf32> to vector<8x256xf32>
    %14 = arith.addf %11, %13 : vector<8x256xf32>
    %cst_11 = arith.constant 0.000000e+00 : f32
    %15 = vector.broadcast %cst_11 : f32 to vector<8x256xf32>
    %16 = arith.maximumf %14, %15 : vector<8x256xf32>
    %17 = arith.truncf %16 : vector<8x256xf32> to vector<8x256xbf16>
    %c0_12 = arith.constant 0 : index
    %c0_13 = arith.constant 0 : index
    %18 = vector.load %arg6[%c0_12, %c0_13] : memref<256x128xbf16, #tpu.memory_space<vmem>>, vector<256x128xbf16>
    %cst_14 = arith.constant dense<0.000000e+00> : vector<8x128xf32>
    %19 = tpu.matmul %17, %18, %cst_14 {dimension_numbers = #tpu.dot_dimension_numbers<[1], [0], [0], [1], [0, 0, 1, 1], [], []>} : vector<8x256xbf16>, vector<256x128xbf16>, vector<8x128xf32> -> vector<8x128xf32>
    %c0_15 = arith.constant 0 : index
    %c0_16 = arith.constant 0 : index
    %20 = vector.load %arg7[%c0_15, %c0_16] : memref<1x128xf32, #tpu.memory_space<vmem>>, vector<1x128xf32>
    %21 = vector.broadcast %20 : vector<1x128xf32> to vector<8x128xf32>
    %22 = arith.addf %19, %21 : vector<8x128xf32>
    %cst_17 = arith.constant 0.000000e+00 : f32
    %23 = vector.broadcast %cst_17 : f32 to vector<8x128xf32>
    %24 = arith.maximumf %22, %23 : vector<8x128xf32>
    %25 = arith.truncf %24 : vector<8x128xf32> to vector<8x128xbf16>
    %c0_18 = arith.constant 0 : index
    %c0_19 = arith.constant 0 : index
    %26 = vector.load %arg8[%c0_18, %c0_19] : memref<128x128xbf16, #tpu.memory_space<vmem>>, vector<128x128xbf16>
    %cst_20 = arith.constant dense<0.000000e+00> : vector<8x128xf32>
    %27 = tpu.matmul %25, %26, %cst_20 {dimension_numbers = #tpu.dot_dimension_numbers<[1], [0], [0], [1], [0, 0, 1, 1], [], []>} : vector<8x128xbf16>, vector<128x128xbf16>, vector<8x128xf32> -> vector<8x128xf32>
    %c0_21 = arith.constant 0 : index
    %c0_22 = arith.constant 0 : index
    %28 = vector.load %arg9[%c0_21, %c0_22] : memref<1x128xf32, #tpu.memory_space<vmem>>, vector<1x128xf32>
    %29 = vector.broadcast %28 : vector<1x128xf32> to vector<8x128xf32>
    %30 = arith.addf %27, %29 : vector<8x128xf32>
    %cst_23 = arith.constant 0.000000e+00 : f32
    %31 = vector.broadcast %cst_23 : f32 to vector<8x128xf32>
    %32 = arith.maximumf %30, %31 : vector<8x128xf32>
    %33 = arith.truncf %32 : vector<8x128xf32> to vector<8x128xbf16>
    %c0_24 = arith.constant 0 : index
    %c0_25 = arith.constant 0 : index
    %34 = vector.load %arg10[%c0_24, %c0_25] : memref<128x128xbf16, #tpu.memory_space<vmem>>, vector<128x128xbf16>
    %cst_26 = arith.constant dense<0.000000e+00> : vector<8x128xf32>
    %35 = tpu.matmul %33, %34, %cst_26 {dimension_numbers = #tpu.dot_dimension_numbers<[1], [0], [0], [1], [0, 0, 1, 1], [], []>} : vector<8x128xbf16>, vector<128x128xbf16>, vector<8x128xf32> -> vector<8x128xf32>
    %c0_27 = arith.constant 0 : index
    %c0_28 = arith.constant 0 : index
    %36 = vector.load %arg11[%c0_27, %c0_28] : memref<1x128xf32, #tpu.memory_space<vmem>>, vector<1x128xf32>
    %37 = vector.broadcast %36 : vector<1x128xf32> to vector<8x128xf32>
    %38 = arith.addf %35, %37 : vector<8x128xf32>
    %cst_29 = arith.constant 0.000000e+00 : f32
    %39 = vector.broadcast %cst_29 : f32 to vector<8x128xf32>
    %40 = arith.maximumf %38, %39 : vector<8x128xf32>
    %41 = arith.truncf %40 : vector<8x128xf32> to vector<8x128xbf16>
    %c0_30 = arith.constant 0 : index
    %c0_31 = arith.constant 0 : index
    %42 = vector.load %arg12[%c0_30, %c0_31] : memref<128x128xbf16, #tpu.memory_space<vmem>>, vector<128x128xbf16>
    %cst_32 = arith.constant dense<0.000000e+00> : vector<8x128xf32>
    %43 = tpu.matmul %41, %42, %cst_32 {dimension_numbers = #tpu.dot_dimension_numbers<[1], [0], [0], [1], [0, 0, 1, 1], [], []>} : vector<8x128xbf16>, vector<128x128xbf16>, vector<8x128xf32> -> vector<8x128xf32>
    %c0_33 = arith.constant 0 : index
    %c0_34 = arith.constant 0 : index
    %44 = vector.load %arg13[%c0_33, %c0_34] : memref<1x128xf32, #tpu.memory_space<vmem>>, vector<1x128xf32>
    %45 = vector.broadcast %44 : vector<1x128xf32> to vector<8x128xf32>
    %46 = arith.addf %43, %45 : vector<8x128xf32>
    %47 = tpu.iota {dimensions = array<i32: 1>} : vector<8x128xi32>
    %c10_i32 = arith.constant 10 : i32
    %48 = vector.broadcast %c10_i32 : i32 to vector<8x128xi32>
    %49 = arith.cmpi slt, %47, %48 : vector<8x128xi32>
    %cst_35 = arith.constant -1.000000e+30 : f32
    %50 = vector.broadcast %cst_35 : f32 to vector<8x128xf32>
    %51 = arith.select %49, %46, %50 : vector<8x128xi1>, vector<8x128xf32>
    %cst_36 = arith.constant dense<0xFF800000> : vector<8xf32>
    %52 = vector.multi_reduction <maximumf>, %51, %cst_36 [1] : vector<8x128xf32> to vector<8xf32>
    %53 = vector.shape_cast %52 : vector<8xf32> to vector<8x1xf32>
    %54 = vector.broadcast %53 : vector<8x1xf32> to vector<8x128xf32>
    %55 = arith.subf %51, %54 : vector<8x128xf32>
    %56 = math.exp %55 : vector<8x128xf32>
    %cst_37 = arith.constant dense<0.000000e+00> : vector<8xf32>
    %57 = vector.multi_reduction <add>, %56, %cst_37 [1] : vector<8x128xf32> to vector<8xf32>
    %58 = vector.shape_cast %57 : vector<8xf32> to vector<8x1xf32>
    %59 = math.log %58 : vector<8x1xf32>
    %60 = vector.broadcast %59 : vector<8x1xf32> to vector<8x128xf32>
    %61 = arith.subf %55, %60 : vector<8x128xf32>
    %62 = arith.truncf %61 : vector<8x128xf32> to vector<8x128xbf16>
    %c0_38 = arith.constant 0 : index
    %c0_39 = arith.constant 0 : index
    %63 = vector.load %arg14[%c0_38, %c0_39] : memref<8x128xbf16, #tpu.memory_space<vmem>>, vector<8x128xbf16>
    tpu.vector_store %arg14[%c0_38, %c0_39], %62 {strides = array<i32>} : memref<8x128xbf16, #tpu.memory_space<vmem>>, vector<8x128xbf16>,
    return
  }
  func.func @transform_0(%arg0: i32) -> (i32, i32) {
    %c0_i32 = arith.constant 0 : i32
    %c0_i32_0 = arith.constant 0 : i32
    return %arg0, %c0_i32 : i32, i32
  }
  func.func @transform_1(%arg0: i32) -> (i32, i32) {
    %c0_i32 = arith.constant 0 : i32
    %c0_i32_0 = arith.constant 0 : i32
    %c0_i32_1 = arith.constant 0 : i32
    return %c0_i32, %c0_i32_0 : i32, i32
  }
  func.func @transform_2(%arg0: i32) -> (i32, i32) {
    %c0_i32 = arith.constant 0 : i32
    %c0_i32_0 = arith.constant 0 : i32
    %c0_i32_1 = arith.constant 0 : i32
    return %c0_i32, %c0_i32_0 : i32, i32
  }
  func.func @transform_3(%arg0: i32) -> (i32, i32) {
    %c0_i32 = arith.constant 0 : i32
    %c0_i32_0 = arith.constant 0 : i32
    %c0_i32_1 = arith.constant 0 : i32
    return %c0_i32, %c0_i32_0 : i32, i32
  }
  func.func @transform_4(%arg0: i32) -> (i32, i32) {
    %c0_i32 = arith.constant 0 : i32
    %c0_i32_0 = arith.constant 0 : i32
    %c0_i32_1 = arith.constant 0 : i32
    return %c0_i32, %c0_i32_0 : i32, i32
  }
  func.func @transform_5(%arg0: i32) -> (i32, i32) {
    %c0_i32 = arith.constant 0 : i32
    %c0_i32_0 = arith.constant 0 : i32
    %c0_i32_1 = arith.constant 0 : i32
    return %c0_i32, %c0_i32_0 : i32, i32
  }
  func.func @transform_6(%arg0: i32) -> (i32, i32) {
    %c0_i32 = arith.constant 0 : i32
    %c0_i32_0 = arith.constant 0 : i32
    %c0_i32_1 = arith.constant 0 : i32
    return %c0_i32, %c0_i32_0 : i32, i32
  }
  func.func @transform_7(%arg0: i32) -> (i32, i32) {
    %c0_i32 = arith.constant 0 : i32
    %c0_i32_0 = arith.constant 0 : i32
    %c0_i32_1 = arith.constant 0 : i32
    return %c0_i32, %c0_i32_0 : i32, i32
  }
  func.func @transform_8(%arg0: i32) -> (i32, i32) {
    %c0_i32 = arith.constant 0 : i32
    %c0_i32_0 = arith.constant 0 : i32
    %c0_i32_1 = arith.constant 0 : i32
    return %c0_i32, %c0_i32_0 : i32, i32
  }
  func.func @transform_9(%arg0: i32) -> (i32, i32) {
    %c0_i32 = arith.constant 0 : i32
    %c0_i32_0 = arith.constant 0 : i32
    %c0_i32_1 = arith.constant 0 : i32
    return %c0_i32, %c0_i32_0 : i32, i32
  }
  func.func @transform_10(%arg0: i32) -> (i32, i32) {
    %c0_i32 = arith.constant 0 : i32
    %c0_i32_0 = arith.constant 0 : i32
    %c0_i32_1 = arith.constant 0 : i32
    return %c0_i32, %c0_i32_0 : i32, i32
  }
  func.func @transform_11(%arg0: i32) -> (i32, i32) {
    %c0_i32 = arith.constant 0 : i32
    %c0_i32_0 = arith.constant 0 : i32
    %c0_i32_1 = arith.constant 0 : i32
    return %c0_i32, %c0_i32_0 : i32, i32
  }
  func.func @transform_12(%arg0: i32) -> (i32, i32) {
    %c0_i32 = arith.constant 0 : i32
    %c0_i32_0 = arith.constant 0 : i32
    %c0_i32_1 = arith.constant 0 : i32
    return %c0_i32, %c0_i32_0 : i32, i32
  }
  func.func @transform_13(%arg0: i32) -> (i32, i32) {
    %c0_i32 = arith.constant 0 : i32
    %c0_i32_0 = arith.constant 0 : i32
    return %arg0, %c0_i32 : i32, i32
  }
}

</mosaic_0001>

<llo_original>
// kernel: net_forward.1
$region0: #{net_forward.1}
  #allocation0 [shape = 'u32[]', space=smem, size = 0x4, offset = 0x4, fixed_abs, tag = 'smem constant byte address 0x4 - core index']
  #allocation1 [shape = 'u32[72,128]{1,0:T(1,128)}', space=vmem, size = 0x9000, scoped, tag = 'internal scratch']
  %s0 = inlined_call_operand.vmem [shape: f32[8,784], index: 0, kind: input, shape index: {}]
  %s1 = inlined_call_operand.vmem [shape: bf16[784,512], index: 1, kind: input, shape index: {}]
  %s2 = inlined_call_operand.vmem [shape: f32[1,512], index: 2, kind: input, shape index: {}]
  %s3 = inlined_call_operand.vmem [shape: bf16[512,256], index: 3, kind: input, shape index: {}]
  %s4 = inlined_call_operand.vmem [shape: f32[1,256], index: 4, kind: input, shape index: {}]
  %s5 = inlined_call_operand.vmem [shape: bf16[256,128], index: 5, kind: input, shape index: {}]
  %s6 = inlined_call_operand.vmem [shape: f32[1,128], index: 6, kind: input, shape index: {}]
  %s7 = inlined_call_operand.vmem [shape: bf16[128,128], index: 7, kind: input, shape index: {}]
  %s8 = inlined_call_operand.vmem [shape: f32[1,128], index: 8, kind: input, shape index: {}]
  %s9 = inlined_call_operand.vmem [shape: bf16[128,128], index: 9, kind: input, shape index: {}]
  %s10 = inlined_call_operand.vmem [shape: f32[1,128], index: 10, kind: input, shape index: {}]
  %s11 = inlined_call_operand.vmem [shape: bf16[128,128], index: 11, kind: input, shape index: {}]
  %s12 = inlined_call_operand.vmem [shape: f32[1,128], index: 12, kind: input, shape index: {}]
  %s13 = inlined_call_operand.vmem [shape: bf16[8,128], index: 13, kind: output, shape index: {}]
  %s14 = sld [smem:[#allocation0]]
  $region62: #{net_forward.1} parent=0
    _
  %s16 = ssub.s32 1, %s14
  %s17 = scalar_select 0, %s16, %s14
  // Predicated region
  $region2: #{net_forward.1} parent=0 // pred_check
    _
  $region3: #{net_forward.1} parent=0 // pred_check_branch
    %19 = sbr.rel (0) target = $region5
  $region4: #{net_forward.1} parent=0 // pred_region
    _
  $region5: #{net_forward.1} parent=0 // pred_fallthru
    _
  // Predicated region
  $region6: #{net_forward.1} parent=0 // pred_check
    _
  $region7: #{net_forward.1} parent=0 // pred_check_branch
    %21 = sbr.rel (0) target = $region9
  $region8: #{net_forward.1} parent=0 // pred_region
    _
  $region9: #{net_forward.1} parent=0 // pred_fallthru
    _
  // Predicated region
  $region10: #{net_forward.1} parent=0 // pred_check
    _
  $region11: #{net_forward.1} parent=0 // pred_check_branch
    %23 = sbr.rel (0) target = $region13
  $region12: #{net_forward.1} parent=0 // pred_region
    _
  $region13: #{net_forward.1} parent=0 // pred_fallthru
    _
  // Predicated region
  $region14: #{net_forward.1} parent=0 // pred_check
    _
  $region15: #{net_forward.1} parent=0 // pred_check_branch
    %25 = sbr.rel (0) target = $region17
  $region16: #{net_forward.1} parent=0 // pred_region
    _
  $region17: #{net_forward.1} parent=0 // pred_fallthru
    _
  // Predicated region
  $region18: #{net_forward.1} parent=0 // pred_check
    _
  $region19: #{net_forward.1} parent=0 // pred_check_branch
    %27 = sbr.rel (0) target = $region21
  $region20: #{net_forward.1} parent=0 // pred_region
    _
  $region21: #{net_forward.1} parent=0 // pred_fallthru
    _
  // Predicated region
  $region22: #{net_forward.1} parent=0 // pred_check
    _
  $region23: #{net_forward.1} parent=0 // pred_check_branch
    %29 = sbr.rel (0) target = $region25
  $region24: #{net_forward.1} parent=0 // pred_region
    _
  $region25: #{net_forward.1} parent=0 // pred_fallthru
    _
  // Predicated region
  $region26: #{net_forward.1} parent=0 // pred_check
    _
  $region27: #{net_forward.1} parent=0 // pred_check_branch
    %31 = sbr.rel (0) target = $region29
  $region28: #{net_forward.1} parent=0 // pred_region
    _
  $region29: #{net_forward.1} parent=0 // pred_fallthru
    _
  // Predicated region
  $region30: #{net_forward.1} parent=0 // pred_check
    _
  $region31: #{net_forward.1} parent=0 // pred_check_branch
    %33 = sbr.rel (0) target = $region33
  $region32: #{net_forward.1} parent=0 // pred_region
    _
  $region33: #{net_forward.1} parent=0 // pred_fallthru
    _
  // Predicated region
  $region34: #{net_forward.1} parent=0 // pred_check
    _
  $region35: #{net_forward.1} parent=0 // pred_check_branch
    %35 = sbr.rel (0) target = $region37
  $region36: #{net_forward.1} parent=0 // pred_region
    _
  $region37: #{net_forward.1} parent=0 // pred_fallthru
    _
  // Predicated region
  $region38: #{net_forward.1} parent=0 // pred_check
    _
  $region39: #{net_forward.1} parent=0 // pred_check_branch
    %37 = sbr.rel (0) target = $region41
  $region40: #{net_forward.1} parent=0 // pred_region
    _
  $region41: #{net_forward.1} parent=0 // pred_fallthru
    _
  // Predicated region
  $region42: #{net_forward.1} parent=0 // pred_check
    _
  $region43: #{net_forward.1} parent=0 // pred_check_branch
    %39 = sbr.rel (0) target = $region45
  $region44: #{net_forward.1} parent=0 // pred_region
    _
  $region45: #{net_forward.1} parent=0 // pred_fallthru
    _
  // Predicated region
  $region46: #{net_forward.1} parent=0 // pred_check
    _
  $region47: #{net_forward.1} parent=0 // pred_check_branch
    %41 = sbr.rel (0) target = $region49
  $region48: #{net_forward.1} parent=0 // pred_region
    _
  $region49: #{net_forward.1} parent=0 // pred_fallthru
    _
  // Predicated region
  $region50: #{net_forward.1} parent=0 // pred_check
    _
  $region51: #{net_forward.1} parent=0 // pred_check_branch
    %43 = sbr.rel (0) target = $region53
  $region52: #{net_forward.1} parent=0 // pred_region
    _
  $region53: #{net_forward.1} parent=0 // pred_fallthru
    _
  %v45 = vld [vmem:[%s0] sm:$0xff]
  %v46 = vld [vmem:[%s0 + $0x8] sm:$0xff]
  %v47 = vld [vmem:[%s0 + $0x10] sm:$0xff]
  %v48 = vld [vmem:[%s0 + $0x18] sm:$0xff]
  %v49 = vld [vmem:[%s0 + $0x20] sm:$0xff]
  %v50 = vld [vmem:[%s0 + $0x28] sm:$0xff]
  %v51 = vld [vmem:[%s0 + $0x30] sm:$0xff]
  %v52 = vpack.c.bf16 %v45, %v45
  %v53 = vpack.c.bf16 %v46, %v46
  %v54 = vpack.c.bf16 %v47, %v47
  %v55 = vpack.c.bf16 %v48, %v48
  %v56 = vpack.c.bf16 %v49, %v49
  %v57 = vpack.c.bf16 %v50, %v50
  %v58 = vpack.c.bf16 %v51, %v51
  %v59 = vld [vmem:[%s1] sm:$0xff]
  %v60 = vld [vmem:[%s1 + $0x8] sm:$0xff]
  %v61 = vld [vmem:[%s1 + $0x10] sm:$0xff]
  %v62 = vld [vmem:[%s1 + $0x18] sm:$0xff]
  %v63 = vld [vmem:[%s1 + $0x20] sm:$0xff]
  %v64 = vld [vmem:[%s1 + $0x28] sm:$0xff]
  %v65 = vld [vmem:[%s1 + $0x30] sm:$0xff]
  %v66 = vld [vmem:[%s1 + $0x38] sm:$0xff]
  %v67 = vld [vmem:[%s1 + $0x40] sm:$0xff]
  %v68 = vld [vmem:[%s1 + $0x48] sm:$0xff]
  %v69 = vld [vmem:[%s1 + $0x50] sm:$0xff]
  %v70 = vld [vmem:[%s1 + $0x58] sm:$0xff]
  %v71 = vld [vmem:[%s1 + $0x60] sm:$0xff]
  %v72 = vld [vmem:[%s1 + $0x68] sm:$0xff]
  %v73 = vld [vmem:[%s1 + $0x70] sm:$0xff]
  %v74 = vld [vmem:[%s1 + $0x78] sm:$0xff]
  %v75 = vld [vmem:[%s1 + $0x80] sm:$0xff]
  %v76 = vld [vmem:[%s1 + $0x88] sm:$0xff]
  %v77 = vld [vmem:[%s1 + $0x90] sm:$0xff]
  %v78 = vld [vmem:[%s1 + $0x98] sm:$0xff]
  %v79 = vld [vmem:[%s1 + $0xa0] sm:$0xff]
  %v80 = vld [vmem:[%s1 + $0xa8] sm:$0xff]
  %v81 = vld [vmem:[%s1 + $0xb0] sm:$0xff]
  %v82 = vld [vmem:[%s1 + $0xb8] sm:$0xff]
  %v83 = vld [vmem:[%s1 + $0xc0] sm:$0xff]
  %v84 = vld [vmem:[%s1 + $0xc8] sm:$0xff]
  %v85 = vld [vmem:[%s1 + $0xd0] sm:$0xff]
  %v86 = vld [vmem:[%s1 + $0xd8] sm:$0xff]
  %v87 = vld [vmem:[%s1 + $0xe0] sm:$0xff]
  %v88 = vld [vmem:[%s1 + $0xe8] sm:$0xff]
  %v89 = vld [vmem:[%s1 + $0xf0] sm:$0xff]
  %v90 = vld [vmem:[%s1 + $0xf8] sm:$0xff]
  %v91 = vld [vmem:[%s1 + $0x100] sm:$0xff]
  %v92 = vld [vmem:[%s1 + $0x108] sm:$0xff]
  %v93 = vld [vmem:[%s1 + $0x110] sm:$0xff]
  %v94 = vld [vmem:[%s1 + $0x118] sm:$0xff]
  %v95 = vld [vmem:[%s1 + $0x120] sm:$0xff]
  %v96 = vld [vmem:[%s1 + $0x128] sm:$0xff]
  %v97 = vld [vmem:[%s1 + $0x130] sm:$0xff]
  %v98 = vld [vmem:[%s1 + $0x138] sm:$0xff]
  %v99 = vld [vmem:[%s1 + $0x140] sm:$0xff]
  %v100 = vld [vmem:[%s1 + $0x148] sm:$0xff]
  %v101 = vld [vmem:[%s1 + $0x150] sm:$0xff]
  %v102 = vld [vmem:[%s1 + $0x158] sm:$0xff]
  %v103 = vld [vmem:[%s1 + $0x160] sm:$0xff]
  %v104 = vld [vmem:[%s1 + $0x168] sm:$0xff]
  %v105 = vld [vmem:[%s1 + $0x170] sm:$0xff]
  %v106 = vld [vmem:[%s1 + $0x178] sm:$0xff]
  %v107 = vld [vmem:[%s1 + $0x180] sm:$0xff]
  %v108 = vld [vmem:[%s1 + $0x188] sm:$0xff]
  %v109 = vld [vmem:[%s1 + $0x190] sm:$0xff]
  %v110 = vld [vmem:[%s1 + $0x198] sm:$0xff]
  %v111 = vld [vmem:[%s1 + $0x1a0] sm:$0xff]
  %v112 = vld [vmem:[%s1 + $0x1a8] sm:$0xff]
  %v113 = vld [vmem:[%s1 + $0x1b0] sm:$0xff]
  %v114 = vld [vmem:[%s1 + $0x1b8] sm:$0xff]
  %v115 = vld [vmem:[%s1 + $0x1c0] sm:$0xff]
  %v116 = vld [vmem:[%s1 + $0x1c8] sm:$0xff]
  %v117 = vld [vmem:[%s1 + $0x1d0] sm:$0xff]
  %v118 = vld [vmem:[%s1 + $0x1d8] sm:$0xff]
  %v119 = vld [vmem:[%s1 + $0x1e0] sm:$0xff]
  %v120 = vld [vmem:[%s1 + $0x1e8] sm:$0xff]
  %v121 = vld [vmem:[%s1 + $0x1f0] sm:$0xff]
  %v122 = vld [vmem:[%s1 + $0x1f8] sm:$0xff]
  %v123 = vld [vmem:[%s1 + $0x200] sm:$0xff]
  %v124 = vld [vmem:[%s1 + $0x208] sm:$0xff]
  %v125 = vld [vmem:[%s1 + $0x210] sm:$0xff]
  %v126 = vld [vmem:[%s1 + $0x218] sm:$0xff]
  %v127 = vld [vmem:[%s1 + $0x220] sm:$0xff]
  %v128 = vld [vmem:[%s1 + $0x228] sm:$0xff]
  %v129 = vld [vmem:[%s1 + $0x230] sm:$0xff]
  %v130 = vld [vmem:[%s1 + $0x238] sm:$0xff]
  %v131 = vld [vmem:[%s1 + $0x240] sm:$0xff]
  %v132 = vld [vmem:[%s1 + $0x248] sm:$0xff]
  %v133 = vld [vmem:[%s1 + $0x250] sm:$0xff]
  %v134 = vld [vmem:[%s1 + $0x258] sm:$0xff]
  %v135 = vld [vmem:[%s1 + $0x260] sm:$0xff]
  %v136 = vld [vmem:[%s1 + $0x268] sm:$0xff]
  %v137 = vld [vmem:[%s1 + $0x270] sm:$0xff]
  %v138 = vld [vmem:[%s1 + $0x278] sm:$0xff]
  %v139 = vld [vmem:[%s1 + $0x280] sm:$0xff]
  %v140 = vld [vmem:[%s1 + $0x288] sm:$0xff]
  %v141 = vld [vmem:[%s1 + $0x290] sm:$0xff]
  %v142 = vld [vmem:[%s1 + $0x298] sm:$0xff]
  %v143 = vld [vmem:[%s1 + $0x2a0] sm:$0xff]
  %v144 = vld [vmem:[%s1 + $0x2a8] sm:$0xff]
  %v145 = vld [vmem:[%s1 + $0x2b0] sm:$0xff]
  %v146 = vld [vmem:[%s1 + $0x2b8] sm:$0xff]
  %v147 = vld [vmem:[%s1 + $0x2c0] sm:$0xff]
  %v148 = vld [vmem:[%s1 + $0x2c8] sm:$0xff]
  %v149 = vld [vmem:[%s1 + $0x2d0] sm:$0xff]
  %v150 = vld [vmem:[%s1 + $0x2d8] sm:$0xff]
  %v151 = vld [vmem:[%s1 + $0x2e0] sm:$0xff]
  %v152 = vld [vmem:[%s1 + $0x2e8] sm:$0xff]
  %v153 = vld [vmem:[%s1 + $0x2f0] sm:$0xff]
  %v154 = vld [vmem:[%s1 + $0x2f8] sm:$0xff]
  %v155 = vld [vmem:[%s1 + $0x300] sm:$0xff]
  %v156 = vld [vmem:[%s1 + $0x308] sm:$0xff]
  %v157 = vld [vmem:[%s1 + $0x310] sm:$0xff]
  %v158 = vld [vmem:[%s1 + $0x318] sm:$0xff]
  %v159 = vld [vmem:[%s1 + $0x320] sm:$0xff]
  %v160 = vld [vmem:[%s1 + $0x328] sm:$0xff]
  %v161 = vld [vmem:[%s1 + $0x330] sm:$0xff]
  %v162 = vld [vmem:[%s1 + $0x338] sm:$0xff]
  %v163 = vld [vmem:[%s1 + $0x340] sm:$0xff]
  %v164 = vld [vmem:[%s1 + $0x348] sm:$0xff]
  %v165 = vld [vmem:[%s1 + $0x350] sm:$0xff]
  %v166 = vld [vmem:[%s1 + $0x358] sm:$0xff]
  %v167 = vld [vmem:[%s1 + $0x360] sm:$0xff]
  %v168 = vld [vmem:[%s1 + $0x368] sm:$0xff]
  %v169 = vld [vmem:[%s1 + $0x370] sm:$0xff]
  %v170 = vld [vmem:[%s1 + $0x378] sm:$0xff]
  %v171 = vld [vmem:[%s1 + $0x380] sm:$0xff]
  %v172 = vld [vmem:[%s1 + $0x388] sm:$0xff]
  %v173 = vld [vmem:[%s1 + $0x390] sm:$0xff]
  %v174 = vld [vmem:[%s1 + $0x398] sm:$0xff]
  %v175 = vld [vmem:[%s1 + $0x3a0] sm:$0xff]
  %v176 = vld [vmem:[%s1 + $0x3a8] sm:$0xff]
  %v177 = vld [vmem:[%s1 + $0x3b0] sm:$0xff]
  %v178 = vld [vmem:[%s1 + $0x3b8] sm:$0xff]
  %v179 = vld [vmem:[%s1 + $0x3c0] sm:$0xff]
  %v180 = vld [vmem:[%s1 + $0x3c8] sm:$0xff]
  %v181 = vld [vmem:[%s1 + $0x3d0] sm:$0xff]
  %v182 = vld [vmem:[%s1 + $0x3d8] sm:$0xff]
  %v183 = vld [vmem:[%s1 + $0x3e0] sm:$0xff]
  %v184 = vld [vmem:[%s1 + $0x3e8] sm:$0xff]
  %v185 = vld [vmem:[%s1 + $0x3f0] sm:$0xff]
  %v186 = vld [vmem:[%s1 + $0x3f8] sm:$0xff]
  %v187 = vld [vmem:[%s1 + $0x400] sm:$0xff]
  %v188 = vld [vmem:[%s1 + $0x408] sm:$0xff]
  %v189 = vld [vmem:[%s1 + $0x410] sm:$0xff]
  %v190 = vld [vmem:[%s1 + $0x418] sm:$0xff]
  %v191 = vld [vmem:[%s1 + $0x420] sm:$0xff]
  %v192 = vld [vmem:[%s1 + $0x428] sm:$0xff]
  %v193 = vld [vmem:[%s1 + $0x430] sm:$0xff]
  %v194 = vld [vmem:[%s1 + $0x438] sm:$0xff]
  %v195 = vld [vmem:[%s1 + $0x440] sm:$0xff]
  %v196 = vld [vmem:[%s1 + $0x448] sm:$0xff]
  %v197 = vld [vmem:[%s1 + $0x450] sm:$0xff]
  %v198 = vld [vmem:[%s1 + $0x458] sm:$0xff]
  %v199 = vld [vmem:[%s1 + $0x460] sm:$0xff]
  %v200 = vld [vmem:[%s1 + $0x468] sm:$0xff]
  %v201 = vld [vmem:[%s1 + $0x470] sm:$0xff]
  %v202 = vld [vmem:[%s1 + $0x478] sm:$0xff]
  %v203 = vld [vmem:[%s1 + $0x480] sm:$0xff]
  %v204 = vld [vmem:[%s1 + $0x488] sm:$0xff]
  %v205 = vld [vmem:[%s1 + $0x490] sm:$0xff]
  %v206 = vld [vmem:[%s1 + $0x498] sm:$0xff]
  %v207 = vld [vmem:[%s1 + $0x4a0] sm:$0xff]
  %v208 = vld [vmem:[%s1 + $0x4a8] sm:$0xff]
  %v209 = vld [vmem:[%s1 + $0x4b0] sm:$0xff]
  %v210 = vld [vmem:[%s1 + $0x4b8] sm:$0xff]
  %v211 = vld [vmem:[%s1 + $0x4c0] sm:$0xff]
  %v212 = vld [vmem:[%s1 + $0x4c8] sm:$0xff]
  %v213 = vld [vmem:[%s1 + $0x4d0] sm:$0xff]
  %v214 = vld [vmem:[%s1 + $0x4d8] sm:$0xff]
  %v215 = vld [vmem:[%s1 + $0x4e0] sm:$0xff]
  %v216 = vld [vmem:[%s1 + $0x4e8] sm:$0xff]
  %v217 = vld [vmem:[%s1 + $0x4f0] sm:$0xff]
  %v218 = vld [vmem:[%s1 + $0x4f8] sm:$0xff]
  %v219 = vld [vmem:[%s1 + $0x500] sm:$0xff]
  %v220 = vld [vmem:[%s1 + $0x508] sm:$0xff]
  %v221 = vld [vmem:[%s1 + $0x510] sm:$0xff]
  %v222 = vld [vmem:[%s1 + $0x518] sm:$0xff]
  %v223 = vld [vmem:[%s1 + $0x520] sm:$0xff]
  %v224 = vld [vmem:[%s1 + $0x528] sm:$0xff]
  %v225 = vld [vmem:[%s1 + $0x530] sm:$0xff]
  %v226 = vld [vmem:[%s1 + $0x538] sm:$0xff]
  %v227 = vld [vmem:[%s1 + $0x540] sm:$0xff]
  %v228 = vld [vmem:[%s1 + $0x548] sm:$0xff]
  %v229 = vld [vmem:[%s1 + $0x550] sm:$0xff]
  %v230 = vld [vmem:[%s1 + $0x558] sm:$0xff]
  %v231 = vld [vmem:[%s1 + $0x560] sm:$0xff]
  %v232 = vld [vmem:[%s1 + $0x568] sm:$0xff]
  %v233 = vld [vmem:[%s1 + $0x570] sm:$0xff]
  %v234 = vld [vmem:[%s1 + $0x578] sm:$0xff]
  %v235 = vld [vmem:[%s1 + $0x580] sm:$0xff]
  %v236 = vld [vmem:[%s1 + $0x588] sm:$0xff]
  %v237 = vld [vmem:[%s1 + $0x590] sm:$0xff]
  %v238 = vld [vmem:[%s1 + $0x598] sm:$0xff]
  %v239 = vld [vmem:[%s1 + $0x5a0] sm:$0xff]
  %v240 = vld [vmem:[%s1 + $0x5a8] sm:$0xff]
  %v241 = vld [vmem:[%s1 + $0x5b0] sm:$0xff]
  %v242 = vld [vmem:[%s1 + $0x5b8] sm:$0xff]
  %v243 = vld [vmem:[%s1 + $0x5c0] sm:$0xff]
  %v244 = vld [vmem:[%s1 + $0x5c8] sm:$0xff]
  %v245 = vld [vmem:[%s1 + $0x5d0] sm:$0xff]
  %v246 = vld [vmem:[%s1 + $0x5d8] sm:$0xff]
  %v247 = vld [vmem:[%s1 + $0x5e0] sm:$0xff]
  %v248 = vld [vmem:[%s1 + $0x5e8] sm:$0xff]
  %v249 = vld [vmem:[%s1 + $0x5f0] sm:$0xff]
  %v250 = vld [vmem:[%s1 + $0x5f8] sm:$0xff]
  %v251 = vld [vmem:[%s1 + $0x600] sm:$0xff]
  %v252 = vld [vmem:[%s1 + $0x608] sm:$0xff]
  %v253 = vld [vmem:[%s1 + $0x610] sm:$0xff]
  %v254 = vld [vmem:[%s1 + $0x618] sm:$0xff]
  %v255 = vld [vmem:[%s2] sm:$0xf]
  %v257 = vperm.slane %v255, 0
  %v258 = vperm.slane %v255, 1
  %v259 = vperm.slane %v255, 2
  %v260 = vperm.slane %v255, 3
  %v461 = vunpack.c.l.b16 %v59
  %v462 = vunpack.c.h.b16 %v59
  %v463 = vunpack.c.l.b16 %v60
  %v464 = vunpack.c.h.b16 %v60
  %v465 = vunpack.c.l.b16 %v61
  %v466 = vunpack.c.h.b16 %v61
  %v467 = vunpack.c.l.b16 %v62
  %v468 = vunpack.c.h.b16 %v62
  %v469 = vunpack.c.l.b16 %v63
  %v470 = vunpack.c.h.b16 %v63
  %v471 = vunpack.c.l.b16 %v64
  %v472 = vunpack.c.h.b16 %v64
  %v473 = vunpack.c.l.b16 %v65
  %v474 = vunpack.c.h.b16 %v65
  %v475 = vunpack.c.l.b16 %v66
  %v476 = vunpack.c.h.b16 %v66
  %v477 = vunpack.c.l.b16 %v67
  %v478 = vunpack.c.h.b16 %v67
  %v479 = vunpack.c.l.b16 %v68
  %v480 = vunpack.c.h.b16 %v68
  %v481 = vunpack.c.l.b16 %v69
  %v482 = vunpack.c.h.b16 %v69
  %v483 = vunpack.c.l.b16 %v70
  %v484 = vunpack.c.h.b16 %v70
  %v485 = vunpack.c.l.b16 %v71
  %v486 = vunpack.c.h.b16 %v71
  %v487 = vunpack.c.l.b16 %v72
  %v488 = vunpack.c.h.b16 %v72
  %v489 = vunpack.c.l.b16 %v73
  %v490 = vunpack.c.h.b16 %v73
  %v491 = vunpack.c.l.b16 %v74
  %v492 = vunpack.c.h.b16 %v74
  %v493 = vunpack.c.l.b16 %v75
  %v494 = vunpack.c.h.b16 %v75
  %v495 = vunpack.c.l.b16 %v76
  %v496 = vunpack.c.h.b16 %v76
  %v497 = vunpack.c.l.b16 %v77
  %v498 = vunpack.c.h.b16 %v77
  %v499 = vunpack.c.l.b16 %v78
  %v500 = vunpack.c.h.b16 %v78
  %v501 = vunpack.c.l.b16 %v79
  %v502 = vunpack.c.h.b16 %v79
  %v503 = vunpack.c.l.b16 %v80
  %v504 = vunpack.c.h.b16 %v80
  %v505 = vunpack.c.l.b16 %v81
  %v506 = vunpack.c.h.b16 %v81
  %v507 = vunpack.c.l.b16 %v82
  %v508 = vunpack.c.h.b16 %v82
  %v509 = vunpack.c.l.b16 %v83
  %v510 = vunpack.c.h.b16 %v83
  %v511 = vunpack.c.l.b16 %v84
  %v512 = vunpack.c.h.b16 %v84
  %v513 = vunpack.c.l.b16 %v85
  %v514 = vunpack.c.h.b16 %v85
  %v515 = vunpack.c.l.b16 %v86
  %v516 = vunpack.c.h.b16 %v86
  %v517 = vunpack.c.l.b16 %v87
  %v518 = vunpack.c.h.b16 %v87
  %v519 = vunpack.c.l.b16 %v88
  %v520 = vunpack.c.h.b16 %v88
  %v521 = vunpack.c.l.b16 %v89
  %v522 = vunpack.c.h.b16 %v89
  %v523 = vunpack.c.l.b16 %v90
  %v524 = vunpack.c.h.b16 %v90
  %v525 = vunpack.c.l.b16 %v91
  %v526 = vunpack.c.h.b16 %v91
  %v527 = vunpack.c.l.b16 %v92
  %v528 = vunpack.c.h.b16 %v92
  %v529 = vunpack.c.l.b16 %v93
  %v530 = vunpack.c.h.b16 %v93
  %v531 = vunpack.c.l.b16 %v94
  %v532 = vunpack.c.h.b16 %v94
  %v533 = vunpack.c.l.b16 %v95
  %v534 = vunpack.c.h.b16 %v95
  %v535 = vunpack.c.l.b16 %v96
  %v536 = vunpack.c.h.b16 %v96
  %v537 = vunpack.c.l.b16 %v97
  %v538 = vunpack.c.h.b16 %v97
  %v539 = vunpack.c.l.b16 %v98
  %v540 = vunpack.c.h.b16 %v98
  %v541 = vunpack.c.l.b16 %v99
  %v542 = vunpack.c.h.b16 %v99
  %v543 = vunpack.c.l.b16 %v100
  %v544 = vunpack.c.h.b16 %v100
  %v545 = vunpack.c.l.b16 %v101
  %v546 = vunpack.c.h.b16 %v101
  %v547 = vunpack.c.l.b16 %v102
  %v548 = vunpack.c.h.b16 %v102
  %v549 = vunpack.c.l.b16 %v103
  %v550 = vunpack.c.h.b16 %v103
  %v551 = vunpack.c.l.b16 %v104
  %v552 = vunpack.c.h.b16 %v104
  %v553 = vunpack.c.l.b16 %v105
  %v554 = vunpack.c.h.b16 %v105
  %v555 = vunpack.c.l.b16 %v106
  %v556 = vunpack.c.h.b16 %v106
  %v557 = vunpack.c.l.b16 %v107
  %v558 = vunpack.c.h.b16 %v107
  %v559 = vunpack.c.l.b16 %v108
  %v560 = vunpack.c.h.b16 %v108
  %v561 = vunpack.c.l.b16 %v109
  %v562 = vunpack.c.h.b16 %v109
  %v563 = vunpack.c.l.b16 %v110
  %v564 = vunpack.c.h.b16 %v110
  %v565 = vunpack.c.l.b16 %v111
  %v566 = vunpack.c.h.b16 %v111
  %v567 = vunpack.c.l.b16 %v112
  %v568 = vunpack.c.h.b16 %v112
  %v569 = vunpack.c.l.b16 %v113
  %v570 = vunpack.c.h.b16 %v113
  %v571 = vunpack.c.l.b16 %v114
  %v572 = vunpack.c.h.b16 %v114
  %v573 = vunpack.c.l.b16 %v115
  %v574 = vunpack.c.h.b16 %v115
  %v575 = vunpack.c.l.b16 %v116
  %v576 = vunpack.c.h.b16 %v116
  %v577 = vunpack.c.l.b16 %v117
  %v578 = vunpack.c.h.b16 %v117
  %v579 = vunpack.c.l.b16 %v118
  %v580 = vunpack.c.h.b16 %v118
  %v581 = vunpack.c.l.b16 %v119
  %v582 = vunpack.c.h.b16 %v119
  %v583 = vunpack.c.l.b16 %v120
  %v584 = vunpack.c.h.b16 %v120
  %v585 = vunpack.c.l.b16 %v121
  %v586 = vunpack.c.h.b16 %v121
  %v587 = vunpack.c.l.b16 %v122
  %v588 = vunpack.c.h.b16 %v122
  %v589 = vunpack.c.l.b16 %v123
  %v590 = vunpack.c.h.b16 %v123
  %v591 = vunpack.c.l.b16 %v124
  %v592 = vunpack.c.h.b16 %v124
  %v593 = vunpack.c.l.b16 %v125
  %v594 = vunpack.c.h.b16 %v125
  %v595 = vunpack.c.l.b16 %v126
  %v596 = vunpack.c.h.b16 %v126
  %v597 = vunpack.c.l.b16 %v127
  %v598 = vunpack.c.h.b16 %v127
  %v599 = vunpack.c.l.b16 %v128
  %v600 = vunpack.c.h.b16 %v128
  %v601 = vunpack.c.l.b16 %v129
  %v602 = vunpack.c.h.b16 %v129
  %v603 = vunpack.c.l.b16 %v130
  %v604 = vunpack.c.h.b16 %v130
  %v605 = vunpack.c.l.b16 %v131
  %v606 = vunpack.c.h.b16 %v131
  %v607 = vunpack.c.l.b16 %v132
  %v608 = vunpack.c.h.b16 %v132
  %v609 = vunpack.c.l.b16 %v133
  %v610 = vunpack.c.h.b16 %v133
  %v611 = vunpack.c.l.b16 %v134
  %v612 = vunpack.c.h.b16 %v134
  %v613 = vunpack.c.l.b16 %v135
  %v614 = vunpack.c.h.b16 %v135
  %v615 = vunpack.c.l.b16 %v136
  %v616 = vunpack.c.h.b16 %v136
  %v617 = vunpack.c.l.b16 %v137
  %v618 = vunpack.c.h.b16 %v137
  %v619 = vunpack.c.l.b16 %v138
  %v620 = vunpack.c.h.b16 %v138
  %v621 = vunpack.c.l.b16 %v139
  %v622 = vunpack.c.h.b16 %v139
  %v623 = vunpack.c.l.b16 %v140
  %v624 = vunpack.c.h.b16 %v140
  %v625 = vunpack.c.l.b16 %v141
  %v626 = vunpack.c.h.b16 %v141
  %v627 = vunpack.c.l.b16 %v142
  %v628 = vunpack.c.h.b16 %v142
  %v629 = vunpack.c.l.b16 %v143
  %v630 = vunpack.c.h.b16 %v143
  %v631 = vunpack.c.l.b16 %v144
  %v632 = vunpack.c.h.b16 %v144
  %v633 = vunpack.c.l.b16 %v145
  %v634 = vunpack.c.h.b16 %v145
  %v635 = vunpack.c.l.b16 %v146
  %v636 = vunpack.c.h.b16 %v146
  %v637 = vunpack.c.l.b16 %v147
  %v638 = vunpack.c.h.b16 %v147
  %v639 = vunpack.c.l.b16 %v148
  %v640 = vunpack.c.h.b16 %v148
  %v641 = vunpack.c.l.b16 %v149
  %v642 = vunpack.c.h.b16 %v149
  %v643 = vunpack.c.l.b16 %v150
  %v644 = vunpack.c.h.b16 %v150
  %v645 = vunpack.c.l.b16 %v151
  %v646 = vunpack.c.h.b16 %v151
  %v647 = vunpack.c.l.b16 %v152
  %v648 = vunpack.c.h.b16 %v152
  %v649 = vunpack.c.l.b16 %v153
  %v650 = vunpack.c.h.b16 %v153
  %v651 = vunpack.c.l.b16 %v154
  %v652 = vunpack.c.h.b16 %v154
  %v653 = vunpack.c.l.b16 %v155
  %v654 = vunpack.c.h.b16 %v155
  %v655 = vunpack.c.l.b16 %v156
  %v656 = vunpack.c.h.b16 %v156
  %v657 = vunpack.c.l.b16 %v157
  %v658 = vunpack.c.h.b16 %v157
  %v659 = vunpack.c.l.b16 %v158
  %v660 = vunpack.c.h.b16 %v158
  %v661 = vunpack.c.l.b16 %v159
  %v662 = vunpack.c.h.b16 %v159
  %v663 = vunpack.c.l.b16 %v160
  %v664 = vunpack.c.h.b16 %v160
  %v665 = vunpack.c.l.b16 %v161
  %v666 = vunpack.c.h.b16 %v161
  %v667 = vunpack.c.l.b16 %v162
  %v668 = vunpack.c.h.b16 %v162
  %v669 = vunpack.c.l.b16 %v163
  %v670 = vunpack.c.h.b16 %v163
  %v671 = vunpack.c.l.b16 %v164
  %v672 = vunpack.c.h.b16 %v164
  %v673 = vunpack.c.l.b16 %v165
  %v674 = vunpack.c.h.b16 %v165
  %v675 = vunpack.c.l.b16 %v166
  %v676 = vunpack.c.h.b16 %v166
  %v677 = vunpack.c.l.b16 %v167
  %v678 = vunpack.c.h.b16 %v167
  %v679 = vunpack.c.l.b16 %v168
  %v680 = vunpack.c.h.b16 %v168
  %v681 = vunpack.c.l.b16 %v169
  %v682 = vunpack.c.h.b16 %v169
  %v683 = vunpack.c.l.b16 %v170
  %v684 = vunpack.c.h.b16 %v170
  %v685 = vunpack.c.l.b16 %v171
  %v686 = vunpack.c.h.b16 %v171
  %v687 = vunpack.c.l.b16 %v172
  %v688 = vunpack.c.h.b16 %v172
  %v689 = vunpack.c.l.b16 %v173
  %v690 = vunpack.c.h.b16 %v173
  %v691 = vunpack.c.l.b16 %v174
  %v692 = vunpack.c.h.b16 %v174
  %v693 = vunpack.c.l.b16 %v175
  %v694 = vunpack.c.h.b16 %v175
  %v695 = vunpack.c.l.b16 %v176
  %v696 = vunpack.c.h.b16 %v176
  %v697 = vunpack.c.l.b16 %v177
  %v698 = vunpack.c.h.b16 %v177
  %v699 = vunpack.c.l.b16 %v178
  %v700 = vunpack.c.h.b16 %v178
  %v701 = vunpack.c.l.b16 %v179
  %v702 = vunpack.c.h.b16 %v179
  %v703 = vunpack.c.l.b16 %v180
  %v704 = vunpack.c.h.b16 %v180
  %v705 = vunpack.c.l.b16 %v181
  %v706 = vunpack.c.h.b16 %v181
  %v707 = vunpack.c.l.b16 %v182
  %v708 = vunpack.c.h.b16 %v182
  %v709 = vunpack.c.l.b16 %v183
  %v710 = vunpack.c.h.b16 %v183
  %v711 = vunpack.c.l.b16 %v184
  %v712 = vunpack.c.h.b16 %v184
  %v713 = vunpack.c.l.b16 %v185
  %v714 = vunpack.c.h.b16 %v185
  %v715 = vunpack.c.l.b16 %v186
  %v716 = vunpack.c.h.b16 %v186
  %v717 = vunpack.c.l.b16 %v187
  %v718 = vunpack.c.h.b16 %v187
  %v719 = vunpack.c.l.b16 %v188
  %v720 = vunpack.c.h.b16 %v188
  %v721 = vunpack.c.l.b16 %v189
  %v722 = vunpack.c.h.b16 %v189
  %v723 = vunpack.c.l.b16 %v190
  %v724 = vunpack.c.h.b16 %v190
  %v725 = vunpack.c.l.b16 %v191
  %v726 = vunpack.c.h.b16 %v191
  %v727 = vunpack.c.l.b16 %v192
  %v728 = vunpack.c.h.b16 %v192
  %v729 = vunpack.c.l.b16 %v193
  %v730 = vunpack.c.h.b16 %v193
  %v731 = vunpack.c.l.b16 %v194
  %v732 = vunpack.c.h.b16 %v194
  %v733 = vunpack.c.l.b16 %v195
  %v734 = vunpack.c.h.b16 %v195
  %v735 = vunpack.c.l.b16 %v196
  %v736 = vunpack.c.h.b16 %v196
  %v737 = vunpack.c.l.b16 %v197
  %v738 = vunpack.c.h.b16 %v197
  %v739 = vunpack.c.l.b16 %v198
  %v740 = vunpack.c.h.b16 %v198
  %v741 = vunpack.c.l.b16 %v199
  %v742 = vunpack.c.h.b16 %v199
  %v743 = vunpack.c.l.b16 %v200
  %v744 = vunpack.c.h.b16 %v200
  %v745 = vunpack.c.l.b16 %v201
  %v746 = vunpack.c.h.b16 %v201
  %v747 = vunpack.c.l.b16 %v202
  %v748 = vunpack.c.h.b16 %v202
  %v749 = vunpack.c.l.b16 %v203
  %v750 = vunpack.c.h.b16 %v203
  %v751 = vunpack.c.l.b16 %v204
  %v752 = vunpack.c.h.b16 %v204
  %v753 = vunpack.c.l.b16 %v205
  %v754 = vunpack.c.h.b16 %v205
  %v755 = vunpack.c.l.b16 %v206
  %v756 = vunpack.c.h.b16 %v206
  %v757 = vunpack.c.l.b16 %v207
  %v758 = vunpack.c.h.b16 %v207
  %v759 = vunpack.c.l.b16 %v208
  %v760 = vunpack.c.h.b16 %v208
  %v761 = vunpack.c.l.b16 %v209
  %v762 = vunpack.c.h.b16 %v209
  %v763 = vunpack.c.l.b16 %v210
  %v764 = vunpack.c.h.b16 %v210
  %v765 = vunpack.c.l.b16 %v211
  %v766 = vunpack.c.h.b16 %v211
  %v767 = vunpack.c.l.b16 %v212
  %v768 = vunpack.c.h.b16 %v212
  %v769 = vunpack.c.l.b16 %v213
  %v770 = vunpack.c.h.b16 %v213
  %v771 = vunpack.c.l.b16 %v214
  %v772 = vunpack.c.h.b16 %v214
  %v773 = vunpack.c.l.b16 %v215
  %v774 = vunpack.c.h.b16 %v215
  %v775 = vunpack.c.l.b16 %v216
  %v776 = vunpack.c.h.b16 %v216
  %v777 = vunpack.c.l.b16 %v217
  %v778 = vunpack.c.h.b16 %v217
  %v779 = vunpack.c.l.b16 %v218
  %v780 = vunpack.c.h.b16 %v218
  %v781 = vunpack.c.l.b16 %v219
  %v782 = vunpack.c.h.b16 %v219
  %v783 = vunpack.c.l.b16 %v220
  %v784 = vunpack.c.h.b16 %v220
  %v785 = vunpack.c.l.b16 %v221
  %v786 = vunpack.c.h.b16 %v221
  %v787 = vunpack.c.l.b16 %v222
  %v788 = vunpack.c.h.b16 %v222
  %v789 = vunpack.c.l.b16 %v223
  %v790 = vunpack.c.h.b16 %v223
  %v791 = vunpack.c.l.b16 %v224
  %v792 = vunpack.c.h.b16 %v224
  %v793 = vunpack.c.l.b16 %v225
  %v794 = vunpack.c.h.b16 %v225
  %v795 = vunpack.c.l.b16 %v226
  %v796 = vunpack.c.h.b16 %v226
  %v797 = vunpack.c.l.b16 %v227
  %v798 = vunpack.c.h.b16 %v227
  %v799 = vunpack.c.l.b16 %v228
  %v800 = vunpack.c.h.b16 %v228
  %v801 = vunpack.c.l.b16 %v229
  %v802 = vunpack.c.h.b16 %v229
  %v803 = vunpack.c.l.b16 %v230
  %v804 = vunpack.c.h.b16 %v230
  %v805 = vunpack.c.l.b16 %v231
  %v806 = vunpack.c.h.b16 %v231
  %v807 = vunpack.c.l.b16 %v232
  %v808 = vunpack.c.h.b16 %v232
  %v809 = vunpack.c.l.b16 %v233
  %v810 = vunpack.c.h.b16 %v233
  %v811 = vunpack.c.l.b16 %v234
  %v812 = vunpack.c.h.b16 %v234
  %v813 = vunpack.c.l.b16 %v235
  %v814 = vunpack.c.h.b16 %v235
  %v815 = vunpack.c.l.b16 %v236
  %v816 = vunpack.c.h.b16 %v236
  %v817 = vunpack.c.l.b16 %v237
  %v818 = vunpack.c.h.b16 %v237
  %v819 = vunpack.c.l.b16 %v238
  %v820 = vunpack.c.h.b16 %v238
  %v821 = vunpack.c.l.b16 %v239
  %v822 = vunpack.c.h.b16 %v239
  %v823 = vunpack.c.l.b16 %v240
  %v824 = vunpack.c.h.b16 %v240
  %v825 = vunpack.c.l.b16 %v241
  %v826 = vunpack.c.h.b16 %v241
  %v827 = vunpack.c.l.b16 %v242
  %v828 = vunpack.c.h.b16 %v242
  %v829 = vunpack.c.l.b16 %v243
  %v830 = vunpack.c.h.b16 %v243
  %v831 = vunpack.c.l.b16 %v244
  %v832 = vunpack.c.h.b16 %v244
  %v833 = vunpack.c.l.b16 %v245
  %v834 = vunpack.c.h.b16 %v245
  %v835 = vunpack.c.l.b16 %v246
  %v836 = vunpack.c.h.b16 %v246
  %v837 = vunpack.c.l.b16 %v247
  %v838 = vunpack.c.h.b16 %v247
  %v839 = vunpack.c.l.b16 %v248
  %v840 = vunpack.c.h.b16 %v248
  %v841 = vunpack.c.l.b16 %v249
  %v842 = vunpack.c.h.b16 %v249
  %v843 = vunpack.c.l.b16 %v250
  %v844 = vunpack.c.h.b16 %v250
  %v845 = vunpack.c.l.b16 %v251
  %v846 = vunpack.c.h.b16 %v251
  %v847 = vunpack.c.l.b16 %v252
  %v848 = vunpack.c.h.b16 %v252
  %v849 = vunpack.c.l.b16 %v253
  %v850 = vunpack.c.h.b16 %v253
  %v851 = vunpack.c.l.b16 %v254
  %v852 = vunpack.c.h.b16 %v254
  %v853 = vpack.c.b16 %v465, %v461
  %v854 = vpack.c.b16 %v466, %v462
  %v855 = vpack.c.b16 %v467, %v463
  %v856 = vpack.c.b16 %v468, %v464
  %v857 = vpack.c.b16 %v473, %v469
  %v858 = vpack.c.b16 %v474, %v470
  %v859 = vpack.c.b16 %v475, %v471
  %v860 = vpack.c.b16 %v476, %v472
  %v861 = vpack.c.b16 %v481, %v477
  %v862 = vpack.c.b16 %v482, %v478
  %v863 = vpack.c.b16 %v483, %v479
  %v864 = vpack.c.b16 %v484, %v480
  %v865 = vpack.c.b16 %v489, %v485
  %v866 = vpack.c.b16 %v490, %v486
  %v867 = vpack.c.b16 %v491, %v487
  %v868 = vpack.c.b16 %v492, %v488
  %v869 = vpack.c.b16 %v497, %v493
  %v870 = vpack.c.b16 %v498, %v494
  %v871 = vpack.c.b16 %v499, %v495
  %v872 = vpack.c.b16 %v500, %v496
  %v873 = vpack.c.b16 %v505, %v501
  %v874 = vpack.c.b16 %v506, %v502
  %v875 = vpack.c.b16 %v507, %v503
  %v876 = vpack.c.b16 %v508, %v504
  %v877 = vpack.c.b16 %v513, %v509
  %v878 = vpack.c.b16 %v514, %v510
  %v879 = vpack.c.b16 %v515, %v511
  %v880 = vpack.c.b16 %v516, %v512
  %v881 = vpack.c.b16 %v521, %v517
  %v882 = vpack.c.b16 %v522, %v518
  %v883 = vpack.c.b16 %v523, %v519
  %v884 = vpack.c.b16 %v524, %v520
  %v885 = vpack.c.b16 %v529, %v525
  %v886 = vpack.c.b16 %v530, %v526
  %v887 = vpack.c.b16 %v531, %v527
  %v888 = vpack.c.b16 %v532, %v528
  %v889 = vpack.c.b16 %v537, %v533
  %v890 = vpack.c.b16 %v538, %v534
  %v891 = vpack.c.b16 %v539, %v535
  %v892 = vpack.c.b16 %v540, %v536
  %v893 = vpack.c.b16 %v545, %v541
  %v894 = vpack.c.b16 %v546, %v542
  %v895 = vpack.c.b16 %v547, %v543
  %v896 = vpack.c.b16 %v548, %v544
  %v897 = vpack.c.b16 %v553, %v549
  %v898 = vpack.c.b16 %v554, %v550
  %v899 = vpack.c.b16 %v555, %v551
  %v900 = vpack.c.b16 %v556, %v552
  %v901 = vpack.c.b16 %v561, %v557
  %v902 = vpack.c.b16 %v562, %v558
  %v903 = vpack.c.b16 %v563, %v559
  %v904 = vpack.c.b16 %v564, %v560
  %v905 = vpack.c.b16 %v569, %v565
  %v906 = vpack.c.b16 %v570, %v566
  %v907 = vpack.c.b16 %v571, %v567
  %v908 = vpack.c.b16 %v572, %v568
  %v909 = vpack.c.b16 %v577, %v573
  %v910 = vpack.c.b16 %v578, %v574
  %v911 = vpack.c.b16 %v579, %v575
  %v912 = vpack.c.b16 %v580, %v576
  %v913 = vpack.c.b16 %v585, %v581
  %v914 = vpack.c.b16 %v586, %v582
  %v915 = vpack.c.b16 %v587, %v583
  %v916 = vpack.c.b16 %v588, %v584
  %v917 = vpack.c.b16 %v593, %v589
  %v918 = vpack.c.b16 %v594, %v590
  %v919 = vpack.c.b16 %v595, %v591
  %v920 = vpack.c.b16 %v596, %v592
  %v921 = vpack.c.b16 %v601, %v597
  %v922 = vpack.c.b16 %v602, %v598
  %v923 = vpack.c.b16 %v603, %v599
  %v924 = vpack.c.b16 %v604, %v600
  %v925 = vpack.c.b16 %v609, %v605
  %v926 = vpack.c.b16 %v610, %v606
  %v927 = vpack.c.b16 %v611, %v607
  %v928 = vpack.c.b16 %v612, %v608
  %v929 = vpack.c.b16 %v617, %v613
  %v930 = vpack.c.b16 %v618, %v614
  %v931 = vpack.c.b16 %v619, %v615
  %v932 = vpack.c.b16 %v620, %v616
  %v933 = vpack.c.b16 %v625, %v621
  %v934 = vpack.c.b16 %v626, %v622
  %v935 = vpack.c.b16 %v627, %v623
  %v936 = vpack.c.b16 %v628, %v624
  %v937 = vpack.c.b16 %v633, %v629
  %v938 = vpack.c.b16 %v634, %v630
  %v939 = vpack.c.b16 %v635, %v631
  %v940 = vpack.c.b16 %v636, %v632
  %v941 = vpack.c.b16 %v641, %v637
  %v942 = vpack.c.b16 %v642, %v638
  %v943 = vpack.c.b16 %v643, %v639
  %v944 = vpack.c.b16 %v644, %v640
  %v945 = vpack.c.b16 %v649, %v645
  %v946 = vpack.c.b16 %v650, %v646
  %v947 = vpack.c.b16 %v651, %v647
  %v948 = vpack.c.b16 %v652, %v648
  %v949 = vpack.c.b16 %v657, %v653
  %v950 = vpack.c.b16 %v658, %v654
  %v951 = vpack.c.b16 %v659, %v655
  %v952 = vpack.c.b16 %v660, %v656
  %v953 = vpack.c.b16 %v665, %v661
  %v954 = vpack.c.b16 %v666, %v662
  %v955 = vpack.c.b16 %v667, %v663
  %v956 = vpack.c.b16 %v668, %v664
  %v957 = vpack.c.b16 %v673, %v669
  %v958 = vpack.c.b16 %v674, %v670
  %v959 = vpack.c.b16 %v675, %v671
  %v960 = vpack.c.b16 %v676, %v672
  %v961 = vpack.c.b16 %v681, %v677
  %v962 = vpack.c.b16 %v682, %v678
  %v963 = vpack.c.b16 %v683, %v679
  %v964 = vpack.c.b16 %v684, %v680
  %v965 = vpack.c.b16 %v689, %v685
  %v966 = vpack.c.b16 %v690, %v686
  %v967 = vpack.c.b16 %v691, %v687
  %v968 = vpack.c.b16 %v692, %v688
  %v969 = vpack.c.b16 %v697, %v693
  %v970 = vpack.c.b16 %v698, %v694
  %v971 = vpack.c.b16 %v699, %v695
  %v972 = vpack.c.b16 %v700, %v696
  %v973 = vpack.c.b16 %v705, %v701
  %v974 = vpack.c.b16 %v706, %v702
  %v975 = vpack.c.b16 %v707, %v703
  %v976 = vpack.c.b16 %v708, %v704
  %v977 = vpack.c.b16 %v713, %v709
  %v978 = vpack.c.b16 %v714, %v710
  %v979 = vpack.c.b16 %v715, %v711
  %v980 = vpack.c.b16 %v716, %v712
  %v981 = vpack.c.b16 %v721, %v717
  %v982 = vpack.c.b16 %v722, %v718
  %v983 = vpack.c.b16 %v723, %v719
  %v984 = vpack.c.b16 %v724, %v720
  %v985 = vpack.c.b16 %v729, %v725
  %v986 = vpack.c.b16 %v730, %v726
  %v987 = vpack.c.b16 %v731, %v727
  %v988 = vpack.c.b16 %v732, %v728
  %v989 = vpack.c.b16 %v737, %v733
  %v990 = vpack.c.b16 %v738, %v734
  %v991 = vpack.c.b16 %v739, %v735
  %v992 = vpack.c.b16 %v740, %v736
  %v993 = vpack.c.b16 %v745, %v741
  %v994 = vpack.c.b16 %v746, %v742
  %v995 = vpack.c.b16 %v747, %v743
  %v996 = vpack.c.b16 %v748, %v744
  %v997 = vpack.c.b16 %v753, %v749
  %v998 = vpack.c.b16 %v754, %v750
  %v999 = vpack.c.b16 %v755, %v751
  %v1000 = vpack.c.b16 %v756, %v752
  %v1001 = vpack.c.b16 %v761, %v757
  %v1002 = vpack.c.b16 %v762, %v758
  %v1003 = vpack.c.b16 %v763, %v759
  %v1004 = vpack.c.b16 %v764, %v760
  %v1005 = vpack.c.b16 %v769, %v765
  %v1006 = vpack.c.b16 %v770, %v766
  %v1007 = vpack.c.b16 %v771, %v767
  %v1008 = vpack.c.b16 %v772, %v768
  %v1009 = vpack.c.b16 %v777, %v773
  %v1010 = vpack.c.b16 %v778, %v774
  %v1011 = vpack.c.b16 %v779, %v775
  %v1012 = vpack.c.b16 %v780, %v776
  %v1013 = vpack.c.b16 %v785, %v781
  %v1014 = vpack.c.b16 %v786, %v782
  %v1015 = vpack.c.b16 %v787, %v783
  %v1016 = vpack.c.b16 %v788, %v784
  %v1017 = vpack.c.b16 %v793, %v789
  %v1018 = vpack.c.b16 %v794, %v790
  %v1019 = vpack.c.b16 %v795, %v791
  %v1020 = vpack.c.b16 %v796, %v792
  %v1021 = vpack.c.b16 %v801, %v797
  %v1022 = vpack.c.b16 %v802, %v798
  %v1023 = vpack.c.b16 %v803, %v799
  %v1024 = vpack.c.b16 %v804, %v800
  %v1025 = vpack.c.b16 %v809, %v805
  %v1026 = vpack.c.b16 %v810, %v806
  %v1027 = vpack.c.b16 %v811, %v807
  %v1028 = vpack.c.b16 %v812, %v808
  %v1029 = vpack.c.b16 %v817, %v813
  %v1030 = vpack.c.b16 %v818, %v814
  %v1031 = vpack.c.b16 %v819, %v815
  %v1032 = vpack.c.b16 %v820, %v816
  %v1033 = vpack.c.b16 %v825, %v821
  %v1034 = vpack.c.b16 %v826, %v822
  %v1035 = vpack.c.b16 %v827, %v823
  %v1036 = vpack.c.b16 %v828, %v824
  %v1037 = vpack.c.b16 %v833, %v829
  %v1038 = vpack.c.b16 %v834, %v830
  %v1039 = vpack.c.b16 %v835, %v831
  %v1040 = vpack.c.b16 %v836, %v832
  %v1041 = vpack.c.b16 %v841, %v837
  %v1042 = vpack.c.b16 %v842, %v838
  %v1043 = vpack.c.b16 %v843, %v839
  %v1044 = vpack.c.b16 %v844, %v840
  %v1045 = vpack.c.b16 %v849, %v845
  %v1046 = vpack.c.b16 %v850, %v846
  %v1047 = vpack.c.b16 %v851, %v847
  %v1048 = vpack.c.b16 %v852, %v848
  %vm1245 = vcmask 130048
  %v1247 = vsel %vm1245, %v58, 0
  %1249 = vmatpush.bf16.msra.mxu0 %v881
  %1250 = vmatpush.bf16.msra.mxu0 %v877
  %1251 = vmatpush.bf16.msra.mxu0 %v873
  %1252 = vmatpush.bf16.msra.mxu0 %v869
  %1253 = vmatpush.bf16.msra.mxu0 %v865
  %1254 = vmatpush.bf16.msra.mxu0 %v861
  %1255 = vmatpush.bf16.msra.mxu0 %v857
  %1256 = vmatpush.bf16.msra.mxu0 %v853
  %1257 = vmatmul.bf16.gmra.mxu0 %v52
  %v1258 = vpop.f32.mrf.mxu0
  %v1259 = vadd.f32 %v257, %v1258
  %v1260 = vpop.f32.mrf.mxu0
  %1261 = vdwg.mxu0
  %1262 = vmatpush.bf16.msra.mxu0 %v913
  %1263 = vmatpush.bf16.msra.mxu0 %v909
  %1264 = vmatpush.bf16.msra.mxu0 %v905
  %1265 = vmatpush.bf16.msra.mxu0 %v901
  %1266 = vmatpush.bf16.msra.mxu0 %v897
  %1267 = vmatpush.bf16.msra.mxu0 %v893
  %1268 = vmatpush.bf16.msra.mxu0 %v889
  %1269 = vmatpush.bf16.msra.mxu0 %v885
  %1270 = vmatmul.bf16.gmra.mxu0 %v53
  %v1271 = vpop.f32.mrf.mxu0
  %v1272 = vadd.f32 %v1259, %v1271
  %v1273 = vpop.f32.mrf.mxu0
  %1274 = vdwg.mxu0
  %1275 = vmatpush.bf16.msra.mxu0 %v945
  %1276 = vmatpush.bf16.msra.mxu0 %v941
  %1277 = vmatpush.bf16.msra.mxu0 %v937
  %1278 = vmatpush.bf16.msra.mxu0 %v933
  %1279 = vmatpush.bf16.msra.mxu0 %v929
  %1280 = vmatpush.bf16.msra.mxu0 %v925
  %1281 = vmatpush.bf16.msra.mxu0 %v921
  %1282 = vmatpush.bf16.msra.mxu0 %v917
  %1283 = vmatmul.bf16.gmra.mxu0 %v54
  %v1284 = vpop.f32.mrf.mxu0
  %v1285 = vadd.f32 %v1272, %v1284
  %v1286 = vpop.f32.mrf.mxu0
  %1287 = vdwg.mxu0
  %1288 = vmatpush.bf16.msra.mxu0 %v977
  %1289 = vmatpush.bf16.msra.mxu0 %v973
  %1290 = vmatpush.bf16.msra.mxu0 %v969
  %1291 = vmatpush.bf16.msra.mxu0 %v965
  %1292 = vmatpush.bf16.msra.mxu0 %v961
  %1293 = vmatpush.bf16.msra.mxu0 %v957
  %1294 = vmatpush.bf16.msra.mxu0 %v953
  %1295 = vmatpush.bf16.msra.mxu0 %v949
  %1296 = vmatmul.bf16.gmra.mxu0 %v55
  %v1297 = vpop.f32.mrf.mxu0
  %v1298 = vadd.f32 %v1285, %v1297
  %v1299 = vpop.f32.mrf.mxu0
  %1300 = vdwg.mxu0
  %1301 = vmatpush.bf16.msra.mxu0 %v1009
  %1302 = vmatpush.bf16.msra.mxu0 %v1005
  %1303 = vmatpush.bf16.msra.mxu0 %v1001
  %1304 = vmatpush.bf16.msra.mxu0 %v997
  %1305 = vmatpush.bf16.msra.mxu0 %v993
  %1306 = vmatpush.bf16.msra.mxu0 %v989
  %1307 = vmatpush.bf16.msra.mxu0 %v985
  %1308 = vmatpush.bf16.msra.mxu0 %v981
  %1309 = vmatmul.bf16.gmra.mxu0 %v56
  %v1310 = vpop.f32.mrf.mxu0
  %v1311 = vadd.f32 %v1298, %v1310
  %v1312 = vpop.f32.mrf.mxu0
  %1313 = vdwg.mxu0
  %1314 = vmatpush.bf16.msra.mxu0 %v1041
  %1315 = vmatpush.bf16.msra.mxu0 %v1037
  %1316 = vmatpush.bf16.msra.mxu0 %v1033
  %1317 = vmatpush.bf16.msra.mxu0 %v1029
  %1318 = vmatpush.bf16.msra.mxu0 %v1025
  %1319 = vmatpush.bf16.msra.mxu0 %v1021
  %1320 = vmatpush.bf16.msra.mxu0 %v1017
  %1321 = vmatpush.bf16.msra.mxu0 %v1013
  %1322 = vmatmul.bf16.gmra.mxu0 %v57
  %v1323 = vpop.f32.mrf.mxu0
  %v1324 = vadd.f32 %v1311, %v1323
  %v1325 = vpop.f32.mrf.mxu0
  %1326 = vdwg.mxu0
  %1327 = vmatpush.bf16.msra.mxu0 0
  %1328 = vmatpush.bf16.msra.mxu0 0
  %1329 = vmatpush.bf16.msra.mxu0 0
  %1330 = vmatpush.bf16.msra.mxu0 0
  %1331 = vmatpush.bf16.msra.mxu0 0
  %1332 = vmatpush.bf16.msra.mxu0 0
  %1333 = vmatpush.bf16.msra.mxu0 0
  %1334 = vmatpush.bf16.msra.mxu0 %v1045
  %1335 = vmatmul.bf16.gmra.mxu0 %v1247
  %v1336 = vpop.f32.mrf.mxu0
  %v1337 = vadd.f32 %v1324, %v1336
  %v1338 = vpop.f32.mrf.mxu0
  %1339 = vdwg.mxu0
  %1340 = vmatpush.bf16.msra.mxu0 %v882
  %1341 = vmatpush.bf16.msra.mxu0 %v878
  %1342 = vmatpush.bf16.msra.mxu0 %v874
  %1343 = vmatpush.bf16.msra.mxu0 %v870
  %1344 = vmatpush.bf16.msra.mxu0 %v866
  %1345 = vmatpush.bf16.msra.mxu0 %v862
  %1346 = vmatpush.bf16.msra.mxu0 %v858
  %1347 = vmatpush.bf16.msra.mxu0 %v854
  %1348 = vmatmul.bf16.gmra.mxu0 %v52
  %v1349 = vpop.f32.mrf.mxu0
  %v1350 = vadd.f32 %v258, %v1349
  %v1351 = vpop.f32.mrf.mxu0
  %1352 = vdwg.mxu0
  %1353 = vmatpush.bf16.msra.mxu0 %v914
  %1354 = vmatpush.bf16.msra.mxu0 %v910
  %1355 = vmatpush.bf16.msra.mxu0 %v906
  %1356 = vmatpush.bf16.msra.mxu0 %v902
  %1357 = vmatpush.bf16.msra.mxu0 %v898
  %1358 = vmatpush.bf16.msra.mxu0 %v894
  %1359 = vmatpush.bf16.msra.mxu0 %v890
  %1360 = vmatpush.bf16.msra.mxu0 %v886
  %1361 = vmatmul.bf16.gmra.mxu0 %v53
  %v1362 = vpop.f32.mrf.mxu0
  %v1363 = vadd.f32 %v1350, %v1362
  %v1364 = vpop.f32.mrf.mxu0
  %1365 = vdwg.mxu0
  %1366 = vmatpush.bf16.msra.mxu0 %v946
  %1367 = vmatpush.bf16.msra.mxu0 %v942
  %1368 = vmatpush.bf16.msra.mxu0 %v938
  %1369 = vmatpush.bf16.msra.mxu0 %v934
  %1370 = vmatpush.bf16.msra.mxu0 %v930
  %1371 = vmatpush.bf16.msra.mxu0 %v926
  %1372 = vmatpush.bf16.msra.mxu0 %v922
  %1373 = vmatpush.bf16.msra.mxu0 %v918
  %1374 = vmatmul.bf16.gmra.mxu0 %v54
  %v1375 = vpop.f32.mrf.mxu0
  %v1376 = vadd.f32 %v1363, %v1375
  %v1377 = vpop.f32.mrf.mxu0
  %1378 = vdwg.mxu0
  %1379 = vmatpush.bf16.msra.mxu0 %v978
  %1380 = vmatpush.bf16.msra.mxu0 %v974
  %1381 = vmatpush.bf16.msra.mxu0 %v970
  %1382 = vmatpush.bf16.msra.mxu0 %v966
  %1383 = vmatpush.bf16.msra.mxu0 %v962
  %1384 = vmatpush.bf16.msra.mxu0 %v958
  %1385 = vmatpush.bf16.msra.mxu0 %v954
  %1386 = vmatpush.bf16.msra.mxu0 %v950
  %1387 = vmatmul.bf16.gmra.mxu0 %v55
  %v1388 = vpop.f32.mrf.mxu0
  %v1389 = vadd.f32 %v1376, %v1388
  %v1390 = vpop.f32.mrf.mxu0
  %1391 = vdwg.mxu0
  %1392 = vmatpush.bf16.msra.mxu0 %v1010
  %1393 = vmatpush.bf16.msra.mxu0 %v1006
  %1394 = vmatpush.bf16.msra.mxu0 %v1002
  %1395 = vmatpush.bf16.msra.mxu0 %v998
  %1396 = vmatpush.bf16.msra.mxu0 %v994
  %1397 = vmatpush.bf16.msra.mxu0 %v990
  %1398 = vmatpush.bf16.msra.mxu0 %v986
  %1399 = vmatpush.bf16.msra.mxu0 %v982
  %1400 = vmatmul.bf16.gmra.mxu0 %v56
  %v1401 = vpop.f32.mrf.mxu0
  %v1402 = vadd.f32 %v1389, %v1401
  %v1403 = vpop.f32.mrf.mxu0
  %1404 = vdwg.mxu0
  %1405 = vmatpush.bf16.msra.mxu0 %v1042
  %1406 = vmatpush.bf16.msra.mxu0 %v1038
  %1407 = vmatpush.bf16.msra.mxu0 %v1034
  %1408 = vmatpush.bf16.msra.mxu0 %v1030
  %1409 = vmatpush.bf16.msra.mxu0 %v1026
  %1410 = vmatpush.bf16.msra.mxu0 %v1022
  %1411 = vmatpush.bf16.msra.mxu0 %v1018
  %1412 = vmatpush.bf16.msra.mxu0 %v1014
  %1413 = vmatmul.bf16.gmra.mxu0 %v57
  %v1414 = vpop.f32.mrf.mxu0
  %v1415 = vadd.f32 %v1402, %v1414
  %v1416 = vpop.f32.mrf.mxu0
  %1417 = vdwg.mxu0
  %1418 = vmatpush.bf16.msra.mxu0 0
  %1419 = vmatpush.bf16.msra.mxu0 0
  %1420 = vmatpush.bf16.msra.mxu0 0
  %1421 = vmatpush.bf16.msra.mxu0 0
  %1422 = vmatpush.bf16.msra.mxu0 0
  %1423 = vmatpush.bf16.msra.mxu0 0
  %1424 = vmatpush.bf16.msra.mxu0 0
  %1425 = vmatpush.bf16.msra.mxu0 %v1046
  %1426 = vmatmul.bf16.gmra.mxu0 %v1247
  %v1427 = vpop.f32.mrf.mxu0
  %v1428 = vadd.f32 %v1415, %v1427
  %v1429 = vpop.f32.mrf.mxu0
  %1430 = vdwg.mxu0
  %1431 = vmatpush.bf16.msra.mxu0 %v883
  %1432 = vmatpush.bf16.msra.mxu0 %v879
  %1433 = vmatpush.bf16.msra.mxu0 %v875
  %1434 = vmatpush.bf16.msra.mxu0 %v871
  %1435 = vmatpush.bf16.msra.mxu0 %v867
  %1436 = vmatpush.bf16.msra.mxu0 %v863
  %1437 = vmatpush.bf16.msra.mxu0 %v859
  %1438 = vmatpush.bf16.msra.mxu0 %v855
  %1439 = vmatmul.bf16.gmra.mxu0 %v52
  %v1440 = vpop.f32.mrf.mxu0
  %v1441 = vadd.f32 %v259, %v1440
  %v1442 = vpop.f32.mrf.mxu0
  %1443 = vdwg.mxu0
  %1444 = vmatpush.bf16.msra.mxu0 %v915
  %1445 = vmatpush.bf16.msra.mxu0 %v911
  %1446 = vmatpush.bf16.msra.mxu0 %v907
  %1447 = vmatpush.bf16.msra.mxu0 %v903
  %1448 = vmatpush.bf16.msra.mxu0 %v899
  %1449 = vmatpush.bf16.msra.mxu0 %v895
  %1450 = vmatpush.bf16.msra.mxu0 %v891
  %1451 = vmatpush.bf16.msra.mxu0 %v887
  %1452 = vmatmul.bf16.gmra.mxu0 %v53
  %v1453 = vpop.f32.mrf.mxu0
  %v1454 = vadd.f32 %v1441, %v1453
  %v1455 = vpop.f32.mrf.mxu0
  %1456 = vdwg.mxu0
  %1457 = vmatpush.bf16.msra.mxu0 %v947
  %1458 = vmatpush.bf16.msra.mxu0 %v943
  %1459 = vmatpush.bf16.msra.mxu0 %v939
  %1460 = vmatpush.bf16.msra.mxu0 %v935
  %1461 = vmatpush.bf16.msra.mxu0 %v931
  %1462 = vmatpush.bf16.msra.mxu0 %v927
  %1463 = vmatpush.bf16.msra.mxu0 %v923
  %1464 = vmatpush.bf16.msra.mxu0 %v919
  %1465 = vmatmul.bf16.gmra.mxu0 %v54
  %v1466 = vpop.f32.mrf.mxu0
  %v1467 = vadd.f32 %v1454, %v1466
  %v1468 = vpop.f32.mrf.mxu0
  %1469 = vdwg.mxu0
  %1470 = vmatpush.bf16.msra.mxu0 %v979
  %1471 = vmatpush.bf16.msra.mxu0 %v975
  %1472 = vmatpush.bf16.msra.mxu0 %v971
  %1473 = vmatpush.bf16.msra.mxu0 %v967
  %1474 = vmatpush.bf16.msra.mxu0 %v963
  %1475 = vmatpush.bf16.msra.mxu0 %v959
  %1476 = vmatpush.bf16.msra.mxu0 %v955
  %1477 = vmatpush.bf16.msra.mxu0 %v951
  %1478 = vmatmul.bf16.gmra.mxu0 %v55
  %v1479 = vpop.f32.mrf.mxu0
  %v1480 = vadd.f32 %v1467, %v1479
  %v1481 = vpop.f32.mrf.mxu0
  %1482 = vdwg.mxu0
  %1483 = vmatpush.bf16.msra.mxu0 %v1011
  %1484 = vmatpush.bf16.msra.mxu0 %v1007
  %1485 = vmatpush.bf16.msra.mxu0 %v1003
  %1486 = vmatpush.bf16.msra.mxu0 %v999
  %1487 = vmatpush.bf16.msra.mxu0 %v995
  %1488 = vmatpush.bf16.msra.mxu0 %v991
  %1489 = vmatpush.bf16.msra.mxu0 %v987
  %1490 = vmatpush.bf16.msra.mxu0 %v983
  %1491 = vmatmul.bf16.gmra.mxu0 %v56
  %v1492 = vpop.f32.mrf.mxu0
  %v1493 = vadd.f32 %v1480, %v1492
  %v1494 = vpop.f32.mrf.mxu0
  %1495 = vdwg.mxu0
  %1496 = vmatpush.bf16.msra.mxu0 %v1043
  %1497 = vmatpush.bf16.msra.mxu0 %v1039
  %1498 = vmatpush.bf16.msra.mxu0 %v1035
  %1499 = vmatpush.bf16.msra.mxu0 %v1031
  %1500 = vmatpush.bf16.msra.mxu0 %v1027
  %1501 = vmatpush.bf16.msra.mxu0 %v1023
  %1502 = vmatpush.bf16.msra.mxu0 %v1019
  %1503 = vmatpush.bf16.msra.mxu0 %v1015
  %1504 = vmatmul.bf16.gmra.mxu0 %v57
  %v1505 = vpop.f32.mrf.mxu0
  %v1506 = vadd.f32 %v1493, %v1505
  %v1507 = vpop.f32.mrf.mxu0
  %1508 = vdwg.mxu0
  %1509 = vmatpush.bf16.msra.mxu0 0
  %1510 = vmatpush.bf16.msra.mxu0 0
  %1511 = vmatpush.bf16.msra.mxu0 0
  %1512 = vmatpush.bf16.msra.mxu0 0
  %1513 = vmatpush.bf16.msra.mxu0 0
  %1514 = vmatpush.bf16.msra.mxu0 0
  %1515 = vmatpush.bf16.msra.mxu0 0
  %1516 = vmatpush.bf16.msra.mxu0 %v1047
  %1517 = vmatmul.bf16.gmra.mxu0 %v1247
  %v1518 = vpop.f32.mrf.mxu0
  %v1519 = vadd.f32 %v1506, %v1518
  %v1520 = vpop.f32.mrf.mxu0
  %1521 = vdwg.mxu0
  %1522 = vmatpush.bf16.msra.mxu0 %v884
  %1523 = vmatpush.bf16.msra.mxu0 %v880
  %1524 = vmatpush.bf16.msra.mxu0 %v876
  %1525 = vmatpush.bf16.msra.mxu0 %v872
  %1526 = vmatpush.bf16.msra.mxu0 %v868
  %1527 = vmatpush.bf16.msra.mxu0 %v864
  %1528 = vmatpush.bf16.msra.mxu0 %v860
  %1529 = vmatpush.bf16.msra.mxu0 %v856
  %1530 = vmatmul.bf16.gmra.mxu0 %v52
  %v1531 = vpop.f32.mrf.mxu0
  %v1532 = vadd.f32 %v260, %v1531
  %v1533 = vpop.f32.mrf.mxu0
  %1534 = vdwg.mxu0
  %1535 = vmatpush.bf16.msra.mxu0 %v916
  %1536 = vmatpush.bf16.msra.mxu0 %v912
  %1537 = vmatpush.bf16.msra.mxu0 %v908
  %1538 = vmatpush.bf16.msra.mxu0 %v904
  %1539 = vmatpush.bf16.msra.mxu0 %v900
  %1540 = vmatpush.bf16.msra.mxu0 %v896
  %1541 = vmatpush.bf16.msra.mxu0 %v892
  %1542 = vmatpush.bf16.msra.mxu0 %v888
  %1543 = vmatmul.bf16.gmra.mxu0 %v53
  %v1544 = vpop.f32.mrf.mxu0
  %v1545 = vadd.f32 %v1532, %v1544
  %v1546 = vpop.f32.mrf.mxu0
  %1547 = vdwg.mxu0
  %1548 = vmatpush.bf16.msra.mxu0 %v948
  %1549 = vmatpush.bf16.msra.mxu0 %v944
  %1550 = vmatpush.bf16.msra.mxu0 %v940
  %1551 = vmatpush.bf16.msra.mxu0 %v936
  %1552 = vmatpush.bf16.msra.mxu0 %v932
  %1553 = vmatpush.bf16.msra.mxu0 %v928
  %1554 = vmatpush.bf16.msra.mxu0 %v924
  %1555 = vmatpush.bf16.msra.mxu0 %v920
  %1556 = vmatmul.bf16.gmra.mxu0 %v54
  %v1557 = vpop.f32.mrf.mxu0
  %v1558 = vadd.f32 %v1545, %v1557
  %v1559 = vpop.f32.mrf.mxu0
  %1560 = vdwg.mxu0
  %1561 = vmatpush.bf16.msra.mxu0 %v980
  %1562 = vmatpush.bf16.msra.mxu0 %v976
  %1563 = vmatpush.bf16.msra.mxu0 %v972
  %1564 = vmatpush.bf16.msra.mxu0 %v968
  %1565 = vmatpush.bf16.msra.mxu0 %v964
  %1566 = vmatpush.bf16.msra.mxu0 %v960
  %1567 = vmatpush.bf16.msra.mxu0 %v956
  %1568 = vmatpush.bf16.msra.mxu0 %v952
  %1569 = vmatmul.bf16.gmra.mxu0 %v55
  %v1570 = vpop.f32.mrf.mxu0
  %v1571 = vadd.f32 %v1558, %v1570
  %v1572 = vpop.f32.mrf.mxu0
  %1573 = vdwg.mxu0
  %1574 = vmatpush.bf16.msra.mxu0 %v1012
  %1575 = vmatpush.bf16.msra.mxu0 %v1008
  %1576 = vmatpush.bf16.msra.mxu0 %v1004
  %1577 = vmatpush.bf16.msra.mxu0 %v1000
  %1578 = vmatpush.bf16.msra.mxu0 %v996
  %1579 = vmatpush.bf16.msra.mxu0 %v992
  %1580 = vmatpush.bf16.msra.mxu0 %v988
  %1581 = vmatpush.bf16.msra.mxu0 %v984
  %1582 = vmatmul.bf16.gmra.mxu0 %v56
  %v1583 = vpop.f32.mrf.mxu0
  %v1584 = vadd.f32 %v1571, %v1583
  %v1585 = vpop.f32.mrf.mxu0
  %1586 = vdwg.mxu0
  %1587 = vmatpush.bf16.msra.mxu0 %v1044
  %1588 = vmatpush.bf16.msra.mxu0 %v1040
  %1589 = vmatpush.bf16.msra.mxu0 %v1036
  %1590 = vmatpush.bf16.msra.mxu0 %v1032
  %1591 = vmatpush.bf16.msra.mxu0 %v1028
  %1592 = vmatpush.bf16.msra.mxu0 %v1024
  %1593 = vmatpush.bf16.msra.mxu0 %v1020
  %1594 = vmatpush.bf16.msra.mxu0 %v1016
  %1595 = vmatmul.bf16.gmra.mxu0 %v57
  %v1596 = vpop.f32.mrf.mxu0
  %v1597 = vadd.f32 %v1584, %v1596
  %v1598 = vpop.f32.mrf.mxu0
  %1599 = vdwg.mxu0
  %1600 = vmatpush.bf16.msra.mxu0 0
  %1601 = vmatpush.bf16.msra.mxu0 0
  %1602 = vmatpush.bf16.msra.mxu0 0
  %1603 = vmatpush.bf16.msra.mxu0 0
  %1604 = vmatpush.bf16.msra.mxu0 0
  %1605 = vmatpush.bf16.msra.mxu0 0
  %1606 = vmatpush.bf16.msra.mxu0 0
  %1607 = vmatpush.bf16.msra.mxu0 %v1048
  %1608 = vmatmul.bf16.gmra.mxu0 %v1247
  %v1609 = vpop.f32.mrf.mxu0
  %v1610 = vadd.f32 %v1597, %v1609
  %v1611 = vpop.f32.mrf.mxu0
  %1612 = vdwg.mxu0
  %v1613 = vmax.f32 %v1337, 0.0
  %v1614 = vmax.f32 %v1428, 0.0
  %v1615 = vmax.f32 %v1519, 0.0
  %v1616 = vmax.f32 %v1610, 0.0
  %v1617 = vpack.c.bf16 %v1613, %v1613
  %v1618 = vpack.c.bf16 %v1614, %v1614
  %v1619 = vpack.c.bf16 %v1615, %v1615
  %v1620 = vpack.c.bf16 %v1616, %v1616
  %v1621 = vld [vmem:[%s3] sm:$0xff]
  %v1622 = vld [vmem:[%s3 + $0x8] sm:$0xff]
  %v1623 = vld [vmem:[%s3 + $0x10] sm:$0xff]
  %v1624 = vld [vmem:[%s3 + $0x18] sm:$0xff]
  %v1625 = vld [vmem:[%s3 + $0x20] sm:$0xff]
  %v1626 = vld [vmem:[%s3 + $0x28] sm:$0xff]
  %v1627 = vld [vmem:[%s3 + $0x30] sm:$0xff]
  %v1628 = vld [vmem:[%s3 + $0x38] sm:$0xff]
  %v1629 = vld [vmem:[%s3 + $0x40] sm:$0xff]
  %v1630 = vld [vmem:[%s3 + $0x48] sm:$0xff]
  %v1631 = vld [vmem:[%s3 + $0x50] sm:$0xff]
  %v1632 = vld [vmem:[%s3 + $0x58] sm:$0xff]
  %v1633 = vld [vmem:[%s3 + $0x60] sm:$0xff]
  %v1634 = vld [vmem:[%s3 + $0x68] sm:$0xff]
  %v1635 = vld [vmem:[%s3 + $0x70] sm:$0xff]
  %v1636 = vld [vmem:[%s3 + $0x78] sm:$0xff]
  %v1637 = vld [vmem:[%s3 + $0x80] sm:$0xff]
  %v1638 = vld [vmem:[%s3 + $0x88] sm:$0xff]
  %v1639 = vld [vmem:[%s3 + $0x90] sm:$0xff]
  %v1640 = vld [vmem:[%s3 + $0x98] sm:$0xff]
  %v1641 = vld [vmem:[%s3 + $0xa0] sm:$0xff]
  %v1642 = vld [vmem:[%s3 + $0xa8] sm:$0xff]
  %v1643 = vld [vmem:[%s3 + $0xb0] sm:$0xff]
  %v1644 = vld [vmem:[%s3 + $0xb8] sm:$0xff]
  %v1645 = vld [vmem:[%s3 + $0xc0] sm:$0xff]
  %v1646 = vld [vmem:[%s3 + $0xc8] sm:$0xff]
  %v1647 = vld [vmem:[%s3 + $0xd0] sm:$0xff]
  %v1648 = vld [vmem:[%s3 + $0xd8] sm:$0xff]
  %v1649 = vld [vmem:[%s3 + $0xe0] sm:$0xff]
  %v1650 = vld [vmem:[%s3 + $0xe8] sm:$0xff]
  %v1651 = vld [vmem:[%s3 + $0xf0] sm:$0xff]
  %v1652 = vld [vmem:[%s3 + $0xf8] sm:$0xff]
  %v1653 = vld [vmem:[%s3 + $0x100] sm:$0xff]
  %v1654 = vld [vmem:[%s3 + $0x108] sm:$0xff]
  %v1655 = vld [vmem:[%s3 + $0x110] sm:$0xff]
  %v1656 = vld [vmem:[%s3 + $0x118] sm:$0xff]
  %v1657 = vld [vmem:[%s3 + $0x120] sm:$0xff]
  %v1658 = vld [vmem:[%s3 + $0x128] sm:$0xff]
  %v1659 = vld [vmem:[%s3 + $0x130] sm:$0xff]
  %v1660 = vld [vmem:[%s3 + $0x138] sm:$0xff]
  %v1661 = vld [vmem:[%s3 + $0x140] sm:$0xff]
  %v1662 = vld [vmem:[%s3 + $0x148] sm:$0xff]
  %v1663 = vld [vmem:[%s3 + $0x150] sm:$0xff]
  %v1664 = vld [vmem:[%s3 + $0x158] sm:$0xff]
  %v1665 = vld [vmem:[%s3 + $0x160] sm:$0xff]
  %v1666 = vld [vmem:[%s3 + $0x168] sm:$0xff]
  %v1667 = vld [vmem:[%s3 + $0x170] sm:$0xff]
  %v1668 = vld [vmem:[%s3 + $0x178] sm:$0xff]
  %v1669 = vld [vmem:[%s3 + $0x180] sm:$0xff]
  %v1670 = vld [vmem:[%s3 + $0x188] sm:$0xff]
  %v1671 = vld [vmem:[%s3 + $0x190] sm:$0xff]
  %v1672 = vld [vmem:[%s3 + $0x198] sm:$0xff]
  %v1673 = vld [vmem:[%s3 + $0x1a0] sm:$0xff]
  %v1674 = vld [vmem:[%s3 + $0x1a8] sm:$0xff]
  %v1675 = vld [vmem:[%s3 + $0x1b0] sm:$0xff]
  %v1676 = vld [vmem:[%s3 + $0x1b8] sm:$0xff]
  %v1677 = vld [vmem:[%s3 + $0x1c0] sm:$0xff]
  %v1678 = vld [vmem:[%s3 + $0x1c8] sm:$0xff]
  %v1679 = vld [vmem:[%s3 + $0x1d0] sm:$0xff]
  %v1680 = vld [vmem:[%s3 + $0x1d8] sm:$0xff]
  %v1681 = vld [vmem:[%s3 + $0x1e0] sm:$0xff]
  %v1682 = vld [vmem:[%s3 + $0x1e8] sm:$0xff]
  %v1683 = vld [vmem:[%s3 + $0x1f0] sm:$0xff]
  %v1684 = vld [vmem:[%s3 + $0x1f8] sm:$0xff]
  %v1685 = vld [vmem:[%s4] sm:$0x3]
  %v1687 = vperm.slane %v1685, 0
  %v1688 = vperm.slane %v1685, 1
  %v1755 = vunpack.c.l.b16 %v1621
  %v1756 = vunpack.c.h.b16 %v1621
  %v1757 = vunpack.c.l.b16 %v1622
  %v1758 = vunpack.c.h.b16 %v1622
  %v1759 = vunpack.c.l.b16 %v1623
  %v1760 = vunpack.c.h.b16 %v1623
  %v1761 = vunpack.c.l.b16 %v1624
  %v1762 = vunpack.c.h.b16 %v1624
  %v1763 = vunpack.c.l.b16 %v1625
  %v1764 = vunpack.c.h.b16 %v1625
  %v1765 = vunpack.c.l.b16 %v1626
  %v1766 = vunpack.c.h.b16 %v1626
  %v1767 = vunpack.c.l.b16 %v1627
  %v1768 = vunpack.c.h.b16 %v1627
  %v1769 = vunpack.c.l.b16 %v1628
  %v1770 = vunpack.c.h.b16 %v1628
  %v1771 = vunpack.c.l.b16 %v1629
  %v1772 = vunpack.c.h.b16 %v1629
  %v1773 = vunpack.c.l.b16 %v1630
  %v1774 = vunpack.c.h.b16 %v1630
  %v1775 = vunpack.c.l.b16 %v1631
  %v1776 = vunpack.c.h.b16 %v1631
  %v1777 = vunpack.c.l.b16 %v1632
  %v1778 = vunpack.c.h.b16 %v1632
  %v1779 = vunpack.c.l.b16 %v1633
  %v1780 = vunpack.c.h.b16 %v1633
  %v1781 = vunpack.c.l.b16 %v1634
  %v1782 = vunpack.c.h.b16 %v1634
  %v1783 = vunpack.c.l.b16 %v1635
  %v1784 = vunpack.c.h.b16 %v1635
  %v1785 = vunpack.c.l.b16 %v1636
  %v1786 = vunpack.c.h.b16 %v1636
  %v1787 = vunpack.c.l.b16 %v1637
  %v1788 = vunpack.c.h.b16 %v1637
  %v1789 = vunpack.c.l.b16 %v1638
  %v1790 = vunpack.c.h.b16 %v1638
  %v1791 = vunpack.c.l.b16 %v1639
  %v1792 = vunpack.c.h.b16 %v1639
  %v1793 = vunpack.c.l.b16 %v1640
  %v1794 = vunpack.c.h.b16 %v1640
  %v1795 = vunpack.c.l.b16 %v1641
  %v1796 = vunpack.c.h.b16 %v1641
  %v1797 = vunpack.c.l.b16 %v1642
  %v1798 = vunpack.c.h.b16 %v1642
  %v1799 = vunpack.c.l.b16 %v1643
  %v1800 = vunpack.c.h.b16 %v1643
  %v1801 = vunpack.c.l.b16 %v1644
  %v1802 = vunpack.c.h.b16 %v1644
  %v1803 = vunpack.c.l.b16 %v1645
  %v1804 = vunpack.c.h.b16 %v1645
  %v1805 = vunpack.c.l.b16 %v1646
  %v1806 = vunpack.c.h.b16 %v1646
  %v1807 = vunpack.c.l.b16 %v1647
  %v1808 = vunpack.c.h.b16 %v1647
  %v1809 = vunpack.c.l.b16 %v1648
  %v1810 = vunpack.c.h.b16 %v1648
  %v1811 = vunpack.c.l.b16 %v1649
  %v1812 = vunpack.c.h.b16 %v1649
  %v1813 = vunpack.c.l.b16 %v1650
  %v1814 = vunpack.c.h.b16 %v1650
  %v1815 = vunpack.c.l.b16 %v1651
  %v1816 = vunpack.c.h.b16 %v1651
  %v1817 = vunpack.c.l.b16 %v1652
  %v1818 = vunpack.c.h.b16 %v1652
  %v1819 = vunpack.c.l.b16 %v1653
  %v1820 = vunpack.c.h.b16 %v1653
  %v1821 = vunpack.c.l.b16 %v1654
  %v1822 = vunpack.c.h.b16 %v1654
  %v1823 = vunpack.c.l.b16 %v1655
  %v1824 = vunpack.c.h.b16 %v1655
  %v1825 = vunpack.c.l.b16 %v1656
  %v1826 = vunpack.c.h.b16 %v1656
  %v1827 = vunpack.c.l.b16 %v1657
  %v1828 = vunpack.c.h.b16 %v1657
  %v1829 = vunpack.c.l.b16 %v1658
  %v1830 = vunpack.c.h.b16 %v1658
  %v1831 = vunpack.c.l.b16 %v1659
  %v1832 = vunpack.c.h.b16 %v1659
  %v1833 = vunpack.c.l.b16 %v1660
  %v1834 = vunpack.c.h.b16 %v1660
  %v1835 = vunpack.c.l.b16 %v1661
  %v1836 = vunpack.c.h.b16 %v1661
  %v1837 = vunpack.c.l.b16 %v1662
  %v1838 = vunpack.c.h.b16 %v1662
  %v1839 = vunpack.c.l.b16 %v1663
  %v1840 = vunpack.c.h.b16 %v1663
  %v1841 = vunpack.c.l.b16 %v1664
  %v1842 = vunpack.c.h.b16 %v1664
  %v1843 = vunpack.c.l.b16 %v1665
  %v1844 = vunpack.c.h.b16 %v1665
  %v1845 = vunpack.c.l.b16 %v1666
  %v1846 = vunpack.c.h.b16 %v1666
  %v1847 = vunpack.c.l.b16 %v1667
  %v1848 = vunpack.c.h.b16 %v1667
  %v1849 = vunpack.c.l.b16 %v1668
  %v1850 = vunpack.c.h.b16 %v1668
  %v1851 = vunpack.c.l.b16 %v1669
  %v1852 = vunpack.c.h.b16 %v1669
  %v1853 = vunpack.c.l.b16 %v1670
  %v1854 = vunpack.c.h.b16 %v1670
  %v1855 = vunpack.c.l.b16 %v1671
  %v1856 = vunpack.c.h.b16 %v1671
  %v1857 = vunpack.c.l.b16 %v1672
  %v1858 = vunpack.c.h.b16 %v1672
  %v1859 = vunpack.c.l.b16 %v1673
  %v1860 = vunpack.c.h.b16 %v1673
  %v1861 = vunpack.c.l.b16 %v1674
  %v1862 = vunpack.c.h.b16 %v1674
  %v1863 = vunpack.c.l.b16 %v1675
  %v1864 = vunpack.c.h.b16 %v1675
  %v1865 = vunpack.c.l.b16 %v1676
  %v1866 = vunpack.c.h.b16 %v1676
  %v1867 = vunpack.c.l.b16 %v1677
  %v1868 = vunpack.c.h.b16 %v1677
  %v1869 = vunpack.c.l.b16 %v1678
  %v1870 = vunpack.c.h.b16 %v1678
  %v1871 = vunpack.c.l.b16 %v1679
  %v1872 = vunpack.c.h.b16 %v1679
  %v1873 = vunpack.c.l.b16 %v1680
  %v1874 = vunpack.c.h.b16 %v1680
  %v1875 = vunpack.c.l.b16 %v1681
  %v1876 = vunpack.c.h.b16 %v1681
  %v1877 = vunpack.c.l.b16 %v1682
  %v1878 = vunpack.c.h.b16 %v1682
  %v1879 = vunpack.c.l.b16 %v1683
  %v1880 = vunpack.c.h.b16 %v1683
  %v1881 = vunpack.c.l.b16 %v1684
  %v1882 = vunpack.c.h.b16 %v1684
  %v1883 = vpack.c.b16 %v1757, %v1755
  %v1884 = vpack.c.b16 %v1758, %v1756
  %v1885 = vpack.c.b16 %v1761, %v1759
  %v1886 = vpack.c.b16 %v1762, %v1760
  %v1887 = vpack.c.b16 %v1765, %v1763
  %v1888 = vpack.c.b16 %v1766, %v1764
  %v1889 = vpack.c.b16 %v1769, %v1767
  %v1890 = vpack.c.b16 %v1770, %v1768
  %v1891 = vpack.c.b16 %v1773, %v1771
  %v1892 = vpack.c.b16 %v1774, %v1772
  %v1893 = vpack.c.b16 %v1777, %v1775
  %v1894 = vpack.c.b16 %v1778, %v1776
  %v1895 = vpack.c.b16 %v1781, %v1779
  %v1896 = vpack.c.b16 %v1782, %v1780
  %v1897 = vpack.c.b16 %v1785, %v1783
  %v1898 = vpack.c.b16 %v1786, %v1784
  %v1899 = vpack.c.b16 %v1789, %v1787
  %v1900 = vpack.c.b16 %v1790, %v1788
  %v1901 = vpack.c.b16 %v1793, %v1791
  %v1902 = vpack.c.b16 %v1794, %v1792
  %v1903 = vpack.c.b16 %v1797, %v1795
  %v1904 = vpack.c.b16 %v1798, %v1796
  %v1905 = vpack.c.b16 %v1801, %v1799
  %v1906 = vpack.c.b16 %v1802, %v1800
  %v1907 = vpack.c.b16 %v1805, %v1803
  %v1908 = vpack.c.b16 %v1806, %v1804
  %v1909 = vpack.c.b16 %v1809, %v1807
  %v1910 = vpack.c.b16 %v1810, %v1808
  %v1911 = vpack.c.b16 %v1813, %v1811
  %v1912 = vpack.c.b16 %v1814, %v1812
  %v1913 = vpack.c.b16 %v1817, %v1815
  %v1914 = vpack.c.b16 %v1818, %v1816
  %v1915 = vpack.c.b16 %v1821, %v1819
  %v1916 = vpack.c.b16 %v1822, %v1820
  %v1917 = vpack.c.b16 %v1825, %v1823
  %v1918 = vpack.c.b16 %v1826, %v1824
  %v1919 = vpack.c.b16 %v1829, %v1827
  %v1920 = vpack.c.b16 %v1830, %v1828
  %v1921 = vpack.c.b16 %v1833, %v1831
  %v1922 = vpack.c.b16 %v1834, %v1832
  %v1923 = vpack.c.b16 %v1837, %v1835
  %v1924 = vpack.c.b16 %v1838, %v1836
  %v1925 = vpack.c.b16 %v1841, %v1839
  %v1926 = vpack.c.b16 %v1842, %v1840
  %v1927 = vpack.c.b16 %v1845, %v1843
  %v1928 = vpack.c.b16 %v1846, %v1844
  %v1929 = vpack.c.b16 %v1849, %v1847
  %v1930 = vpack.c.b16 %v1850, %v1848
  %v1931 = vpack.c.b16 %v1853, %v1851
  %v1932 = vpack.c.b16 %v1854, %v1852
  %v1933 = vpack.c.b16 %v1857, %v1855
  %v1934 = vpack.c.b16 %v1858, %v1856
  %v1935 = vpack.c.b16 %v1861, %v1859
  %v1936 = vpack.c.b16 %v1862, %v1860
  %v1937 = vpack.c.b16 %v1865, %v1863
  %v1938 = vpack.c.b16 %v1866, %v1864
  %v1939 = vpack.c.b16 %v1869, %v1867
  %v1940 = vpack.c.b16 %v1870, %v1868
  %v1941 = vpack.c.b16 %v1873, %v1871
  %v1942 = vpack.c.b16 %v1874, %v1872
  %v1943 = vpack.c.b16 %v1877, %v1875
  %v1944 = vpack.c.b16 %v1878, %v1876
  %v1945 = vpack.c.b16 %v1881, %v1879
  %v1946 = vpack.c.b16 %v1882, %v1880
  %2011 = vmatpush.bf16.msra.mxu0 %v1897
  %2012 = vmatpush.bf16.msra.mxu0 %v1895
  %2013 = vmatpush.bf16.msra.mxu0 %v1893
  %2014 = vmatpush.bf16.msra.mxu0 %v1891
  %2015 = vmatpush.bf16.msra.mxu0 %v1889
  %2016 = vmatpush.bf16.msra.mxu0 %v1887
  %2017 = vmatpush.bf16.msra.mxu0 %v1885
  %2018 = vmatpush.bf16.msra.mxu0 %v1883
  %2019 = vmatmul.bf16.gmra.mxu0 %v1617
  %v2020 = vpop.f32.mrf.mxu0
  %v2021 = vadd.f32 %v1687, %v2020
  %v2022 = vpop.f32.mrf.mxu0
  %2023 = vdwg.mxu0
  %2024 = vmatpush.bf16.msra.mxu0 %v1913
  %2025 = vmatpush.bf16.msra.mxu0 %v1911
  %2026 = vmatpush.bf16.msra.mxu0 %v1909
  %2027 = vmatpush.bf16.msra.mxu0 %v1907
  %2028 = vmatpush.bf16.msra.mxu0 %v1905
  %2029 = vmatpush.bf16.msra.mxu0 %v1903
  %2030 = vmatpush.bf16.msra.mxu0 %v1901
  %2031 = vmatpush.bf16.msra.mxu0 %v1899
  %2032 = vmatmul.bf16.gmra.mxu0 %v1618
  %v2033 = vpop.f32.mrf.mxu0
  %v2034 = vadd.f32 %v2021, %v2033
  %v2035 = vpop.f32.mrf.mxu0
  %2036 = vdwg.mxu0
  %2037 = vmatpush.bf16.msra.mxu0 %v1929
  %2038 = vmatpush.bf16.msra.mxu0 %v1927
  %2039 = vmatpush.bf16.msra.mxu0 %v1925
  %2040 = vmatpush.bf16.msra.mxu0 %v1923
  %2041 = vmatpush.bf16.msra.mxu0 %v1921
  %2042 = vmatpush.bf16.msra.mxu0 %v1919
  %2043 = vmatpush.bf16.msra.mxu0 %v1917
  %2044 = vmatpush.bf16.msra.mxu0 %v1915
  %2045 = vmatmul.bf16.gmra.mxu0 %v1619
  %v2046 = vpop.f32.mrf.mxu0
  %v2047 = vadd.f32 %v2034, %v2046
  %v2048 = vpop.f32.mrf.mxu0
  %2049 = vdwg.mxu0
  %2050 = vmatpush.bf16.msra.mxu0 %v1945
  %2051 = vmatpush.bf16.msra.mxu0 %v1943
  %2052 = vmatpush.bf16.msra.mxu0 %v1941
  %2053 = vmatpush.bf16.msra.mxu0 %v1939
  %2054 = vmatpush.bf16.msra.mxu0 %v1937
  %2055 = vmatpush.bf16.msra.mxu0 %v1935
  %2056 = vmatpush.bf16.msra.mxu0 %v1933
  %2057 = vmatpush.bf16.msra.mxu0 %v1931
  %2058 = vmatmul.bf16.gmra.mxu0 %v1620
  %v2059 = vpop.f32.mrf.mxu0
  %v2060 = vadd.f32 %v2047, %v2059
  %v2061 = vpop.f32.mrf.mxu0
  %2062 = vdwg.mxu0
  %2063 = vmatpush.bf16.msra.mxu0 %v1898
  %2064 = vmatpush.bf16.msra.mxu0 %v1896
  %2065 = vmatpush.bf16.msra.mxu0 %v1894
  %2066 = vmatpush.bf16.msra.mxu0 %v1892
  %2067 = vmatpush.bf16.msra.mxu0 %v1890
  %2068 = vmatpush.bf16.msra.mxu0 %v1888
  %2069 = vmatpush.bf16.msra.mxu0 %v1886
  %2070 = vmatpush.bf16.msra.mxu0 %v1884
  %2071 = vmatmul.bf16.gmra.mxu0 %v1617
  %v2072 = vpop.f32.mrf.mxu0
  %v2073 = vadd.f32 %v1688, %v2072
  %v2074 = vpop.f32.mrf.mxu0
  %2075 = vdwg.mxu0
  %2076 = vmatpush.bf16.msra.mxu0 %v1914
  %2077 = vmatpush.bf16.msra.mxu0 %v1912
  %2078 = vmatpush.bf16.msra.mxu0 %v1910
  %2079 = vmatpush.bf16.msra.mxu0 %v1908
  %2080 = vmatpush.bf16.msra.mxu0 %v1906
  %2081 = vmatpush.bf16.msra.mxu0 %v1904
  %2082 = vmatpush.bf16.msra.mxu0 %v1902
  %2083 = vmatpush.bf16.msra.mxu0 %v1900
  %2084 = vmatmul.bf16.gmra.mxu0 %v1618
  %v2085 = vpop.f32.mrf.mxu0
  %v2086 = vadd.f32 %v2073, %v2085
  %v2087 = vpop.f32.mrf.mxu0
  %2088 = vdwg.mxu0
  %2089 = vmatpush.bf16.msra.mxu0 %v1930
  %2090 = vmatpush.bf16.msra.mxu0 %v1928
  %2091 = vmatpush.bf16.msra.mxu0 %v1926
  %2092 = vmatpush.bf16.msra.mxu0 %v1924
  %2093 = vmatpush.bf16.msra.mxu0 %v1922
  %2094 = vmatpush.bf16.msra.mxu0 %v1920
  %2095 = vmatpush.bf16.msra.mxu0 %v1918
  %2096 = vmatpush.bf16.msra.mxu0 %v1916
  %2097 = vmatmul.bf16.gmra.mxu0 %v1619
  %v2098 = vpop.f32.mrf.mxu0
  %v2099 = vadd.f32 %v2086, %v2098
  %v2100 = vpop.f32.mrf.mxu0
  %2101 = vdwg.mxu0
  %2102 = vmatpush.bf16.msra.mxu0 %v1946
  %2103 = vmatpush.bf16.msra.mxu0 %v1944
  %2104 = vmatpush.bf16.msra.mxu0 %v1942
  %2105 = vmatpush.bf16.msra.mxu0 %v1940
  %2106 = vmatpush.bf16.msra.mxu0 %v1938
  %2107 = vmatpush.bf16.msra.mxu0 %v1936
  %2108 = vmatpush.bf16.msra.mxu0 %v1934
  %2109 = vmatpush.bf16.msra.mxu0 %v1932
  %2110 = vmatmul.bf16.gmra.mxu0 %v1620
  %v2111 = vpop.f32.mrf.mxu0
  %v2112 = vadd.f32 %v2099, %v2111
  %v2113 = vpop.f32.mrf.mxu0
  %2114 = vdwg.mxu0
  %v2115 = vmax.f32 %v2060, 0.0
  %v2116 = vmax.f32 %v2112, 0.0
  %v2117 = vpack.c.bf16 %v2115, %v2115
  %v2118 = vpack.c.bf16 %v2116, %v2116
  %v2119 = vld [vmem:[%s5] sm:$0xf]
  %v2120 = vld [vmem:[%s5 + $0x4] sm:$0xf]
  %v2121 = vld [vmem:[%s5 + $0x8] sm:$0xf]
  %v2122 = vld [vmem:[%s5 + $0xc] sm:$0xf]
  %v2123 = vld [vmem:[%s5 + $0x10] sm:$0xf]
  %v2124 = vld [vmem:[%s5 + $0x14] sm:$0xf]
  %v2125 = vld [vmem:[%s5 + $0x18] sm:$0xf]
  %v2126 = vld [vmem:[%s5 + $0x1c] sm:$0xf]
  %v2127 = vld [vmem:[%s5 + $0x20] sm:$0xf]
  %v2128 = vld [vmem:[%s5 + $0x24] sm:$0xf]
  %v2129 = vld [vmem:[%s5 + $0x28] sm:$0xf]
  %v2130 = vld [vmem:[%s5 + $0x2c] sm:$0xf]
  %v2131 = vld [vmem:[%s5 + $0x30] sm:$0xf]
  %v2132 = vld [vmem:[%s5 + $0x34] sm:$0xf]
  %v2133 = vld [vmem:[%s5 + $0x38] sm:$0xf]
  %v2134 = vld [vmem:[%s5 + $0x3c] sm:$0xf]
  %v2135 = vld [vmem:[%s5 + $0x40] sm:$0xf]
  %v2136 = vld [vmem:[%s5 + $0x44] sm:$0xf]
  %v2137 = vld [vmem:[%s5 + $0x48] sm:$0xf]
  %v2138 = vld [vmem:[%s5 + $0x4c] sm:$0xf]
  %v2139 = vld [vmem:[%s5 + $0x50] sm:$0xf]
  %v2140 = vld [vmem:[%s5 + $0x54] sm:$0xf]
  %v2141 = vld [vmem:[%s5 + $0x58] sm:$0xf]
  %v2142 = vld [vmem:[%s5 + $0x5c] sm:$0xf]
  %v2143 = vld [vmem:[%s5 + $0x60] sm:$0xf]
  %v2144 = vld [vmem:[%s5 + $0x64] sm:$0xf]
  %v2145 = vld [vmem:[%s5 + $0x68] sm:$0xf]
  %v2146 = vld [vmem:[%s5 + $0x6c] sm:$0xf]
  %v2147 = vld [vmem:[%s5 + $0x70] sm:$0xf]
  %v2148 = vld [vmem:[%s5 + $0x74] sm:$0xf]
  %v2149 = vld [vmem:[%s5 + $0x78] sm:$0xf]
  %v2150 = vld [vmem:[%s5 + $0x7c] sm:$0xf]
  %v2151 = vld [vmem:[%s6] sm:$0x1]
  %v2153 = vperm.slane %v2151, 0
  %v2187 = vunpack.c.l.b16 %v2119
  %v2188 = vunpack.c.l.b16 %v2120
  %v2189 = vunpack.c.l.b16 %v2121
  %v2190 = vunpack.c.l.b16 %v2122
  %v2191 = vunpack.c.l.b16 %v2123
  %v2192 = vunpack.c.l.b16 %v2124
  %v2193 = vunpack.c.l.b16 %v2125
  %v2194 = vunpack.c.l.b16 %v2126
  %v2195 = vunpack.c.l.b16 %v2127
  %v2196 = vunpack.c.l.b16 %v2128
  %v2197 = vunpack.c.l.b16 %v2129
  %v2198 = vunpack.c.l.b16 %v2130
  %v2199 = vunpack.c.l.b16 %v2131
  %v2200 = vunpack.c.l.b16 %v2132
  %v2201 = vunpack.c.l.b16 %v2133
  %v2202 = vunpack.c.l.b16 %v2134
  %v2203 = vunpack.c.l.b16 %v2135
  %v2204 = vunpack.c.l.b16 %v2136
  %v2205 = vunpack.c.l.b16 %v2137
  %v2206 = vunpack.c.l.b16 %v2138
  %v2207 = vunpack.c.l.b16 %v2139
  %v2208 = vunpack.c.l.b16 %v2140
  %v2209 = vunpack.c.l.b16 %v2141
  %v2210 = vunpack.c.l.b16 %v2142
  %v2211 = vunpack.c.l.b16 %v2143
  %v2212 = vunpack.c.l.b16 %v2144
  %v2213 = vunpack.c.l.b16 %v2145
  %v2214 = vunpack.c.l.b16 %v2146
  %v2215 = vunpack.c.l.b16 %v2147
  %v2216 = vunpack.c.l.b16 %v2148
  %v2217 = vunpack.c.l.b16 %v2149
  %v2218 = vunpack.c.l.b16 %v2150
  %v2219 = vpack.c.b16 %v2188, %v2187
  %v2220 = vpack.c.b16 %v2190, %v2189
  %v2221 = vpack.c.b16 %v2192, %v2191
  %v2222 = vpack.c.b16 %v2194, %v2193
  %v2223 = vpack.c.b16 %v2196, %v2195
  %v2224 = vpack.c.b16 %v2198, %v2197
  %v2225 = vpack.c.b16 %v2200, %v2199
  %v2226 = vpack.c.b16 %v2202, %v2201
  %v2227 = vpack.c.b16 %v2204, %v2203
  %v2228 = vpack.c.b16 %v2206, %v2205
  %v2229 = vpack.c.b16 %v2208, %v2207
  %v2230 = vpack.c.b16 %v2210, %v2209
  %v2231 = vpack.c.b16 %v2212, %v2211
  %v2232 = vpack.c.b16 %v2214, %v2213
  %v2233 = vpack.c.b16 %v2216, %v2215
  %v2234 = vpack.c.b16 %v2218, %v2217
  %2251 = vmatpush.bf16.msra.mxu0 %v2226
  %2252 = vmatpush.bf16.msra.mxu0 %v2225
  %2253 = vmatpush.bf16.msra.mxu0 %v2224
  %2254 = vmatpush.bf16.msra.mxu0 %v2223
  %2255 = vmatpush.bf16.msra.mxu0 %v2222
  %2256 = vmatpush.bf16.msra.mxu0 %v2221
  %2257 = vmatpush.bf16.msra.mxu0 %v2220
  %2258 = vmatpush.bf16.msra.mxu0 %v2219
  %2259 = vmatmul.bf16.gmra.mxu0 %v2117
  %v2260 = vpop.f32.mrf.mxu0
  %v2261 = vadd.f32 %v2153, %v2260
  %v2262 = vpop.f32.mrf.mxu0
  %2263 = vdwg.mxu0
  %2264 = vmatpush.bf16.msra.mxu0 %v2234
  %2265 = vmatpush.bf16.msra.mxu0 %v2233
  %2266 = vmatpush.bf16.msra.mxu0 %v2232
  %2267 = vmatpush.bf16.msra.mxu0 %v2231
  %2268 = vmatpush.bf16.msra.mxu0 %v2230
  %2269 = vmatpush.bf16.msra.mxu0 %v2229
  %2270 = vmatpush.bf16.msra.mxu0 %v2228
  %2271 = vmatpush.bf16.msra.mxu0 %v2227
  %2272 = vmatmul.bf16.gmra.mxu0 %v2118
  %v2273 = vpop.f32.mrf.mxu0
  %v2274 = vadd.f32 %v2261, %v2273
  %v2275 = vpop.f32.mrf.mxu0
  %2276 = vdwg.mxu0
  %v2277 = vmax.f32 %v2274, 0.0
  %v2278 = vpack.c.bf16 %v2277, %v2277
  %v2279 = vld [vmem:[%s7] sm:$0xf]
  %v2280 = vld [vmem:[%s7 + $0x4] sm:$0xf]
  %v2281 = vld [vmem:[%s7 + $0x8] sm:$0xf]
  %v2282 = vld [vmem:[%s7 + $0xc] sm:$0xf]
  %v2283 = vld [vmem:[%s7 + $0x10] sm:$0xf]
  %v2284 = vld [vmem:[%s7 + $0x14] sm:$0xf]
  %v2285 = vld [vmem:[%s7 + $0x18] sm:$0xf]
  %v2286 = vld [vmem:[%s7 + $0x1c] sm:$0xf]
  %v2287 = vld [vmem:[%s7 + $0x20] sm:$0xf]
  %v2288 = vld [vmem:[%s7 + $0x24] sm:$0xf]
  %v2289 = vld [vmem:[%s7 + $0x28] sm:$0xf]
  %v2290 = vld [vmem:[%s7 + $0x2c] sm:$0xf]
  %v2291 = vld [vmem:[%s7 + $0x30] sm:$0xf]
  %v2292 = vld [vmem:[%s7 + $0x34] sm:$0xf]
  %v2293 = vld [vmem:[%s7 + $0x38] sm:$0xf]
  %v2294 = vld [vmem:[%s7 + $0x3c] sm:$0xf]
  %v2295 = vld [vmem:[%s8] sm:$0x1]
  %v2297 = vperm.slane %v2295, 0
  %v2315 = vunpack.c.l.b16 %v2279
  %v2316 = vunpack.c.l.b16 %v2280
  %v2317 = vunpack.c.l.b16 %v2281
  %v2318 = vunpack.c.l.b16 %v2282
  %v2319 = vunpack.c.l.b16 %v2283
  %v2320 = vunpack.c.l.b16 %v2284
  %v2321 = vunpack.c.l.b16 %v2285
  %v2322 = vunpack.c.l.b16 %v2286
  %v2323 = vunpack.c.l.b16 %v2287
  %v2324 = vunpack.c.l.b16 %v2288
  %v2325 = vunpack.c.l.b16 %v2289
  %v2326 = vunpack.c.l.b16 %v2290
  %v2327 = vunpack.c.l.b16 %v2291
  %v2328 = vunpack.c.l.b16 %v2292
  %v2329 = vunpack.c.l.b16 %v2293
  %v2330 = vunpack.c.l.b16 %v2294
  %v2331 = vpack.c.b16 %v2316, %v2315
  %v2332 = vpack.c.b16 %v2318, %v2317
  %v2333 = vpack.c.b16 %v2320, %v2319
  %v2334 = vpack.c.b16 %v2322, %v2321
  %v2335 = vpack.c.b16 %v2324, %v2323
  %v2336 = vpack.c.b16 %v2326, %v2325
  %v2337 = vpack.c.b16 %v2328, %v2327
  %v2338 = vpack.c.b16 %v2330, %v2329
  %2347 = vmatpush.bf16.msra.mxu0 %v2338
  %2348 = vmatpush.bf16.msra.mxu0 %v2337
  %2349 = vmatpush.bf16.msra.mxu0 %v2336
  %2350 = vmatpush.bf16.msra.mxu0 %v2335
  %2351 = vmatpush.bf16.msra.mxu0 %v2334
  %2352 = vmatpush.bf16.msra.mxu0 %v2333
  %2353 = vmatpush.bf16.msra.mxu0 %v2332
  %2354 = vmatpush.bf16.msra.mxu0 %v2331
  %2355 = vmatmul.bf16.gmra.mxu0 %v2278
  %v2356 = vpop.f32.mrf.mxu0
  %v2357 = vadd.f32 %v2297, %v2356
  %v2358 = vpop.f32.mrf.mxu0
  %2359 = vdwg.mxu0
  %v2360 = vmax.f32 %v2357, 0.0
  %v2361 = vpack.c.bf16 %v2360, %v2360
  %v2362 = vld [vmem:[%s9] sm:$0xf]
  %v2363 = vld [vmem:[%s9 + $0x4] sm:$0xf]
  %v2364 = vld [vmem:[%s9 + $0x8] sm:$0xf]
  %v2365 = vld [vmem:[%s9 + $0xc] sm:$0xf]
  %v2366 = vld [vmem:[%s9 + $0x10] sm:$0xf]
  %v2367 = vld [vmem:[%s9 + $0x14] sm:$0xf]
  %v2368 = vld [vmem:[%s9 + $0x18] sm:$0xf]
  %v2369 = vld [vmem:[%s9 + $0x1c] sm:$0xf]
  %v2370 = vld [vmem:[%s9 + $0x20] sm:$0xf]
  %v2371 = vld [vmem:[%s9 + $0x24] sm:$0xf]
  %v2372 = vld [vmem:[%s9 + $0x28] sm:$0xf]
  %v2373 = vld [vmem:[%s9 + $0x2c] sm:$0xf]
  %v2374 = vld [vmem:[%s9 + $0x30] sm:$0xf]
  %v2375 = vld [vmem:[%s9 + $0x34] sm:$0xf]
  %v2376 = vld [vmem:[%s9 + $0x38] sm:$0xf]
  %v2377 = vld [vmem:[%s9 + $0x3c] sm:$0xf]
  %v2378 = vld [vmem:[%s10] sm:$0x1]
  %v2380 = vperm.slane %v2378, 0
  %v2398 = vunpack.c.l.b16 %v2362
  %v2399 = vunpack.c.l.b16 %v2363
  %v2400 = vunpack.c.l.b16 %v2364
  %v2401 = vunpack.c.l.b16 %v2365
  %v2402 = vunpack.c.l.b16 %v2366
  %v2403 = vunpack.c.l.b16 %v2367
  %v2404 = vunpack.c.l.b16 %v2368
  %v2405 = vunpack.c.l.b16 %v2369
  %v2406 = vunpack.c.l.b16 %v2370
  %v2407 = vunpack.c.l.b16 %v2371
  %v2408 = vunpack.c.l.b16 %v2372
  %v2409 = vunpack.c.l.b16 %v2373
  %v2410 = vunpack.c.l.b16 %v2374
  %v2411 = vunpack.c.l.b16 %v2375
  %v2412 = vunpack.c.l.b16 %v2376
  %v2413 = vunpack.c.l.b16 %v2377
  %v2414 = vpack.c.b16 %v2399, %v2398
  %v2415 = vpack.c.b16 %v2401, %v2400
  %v2416 = vpack.c.b16 %v2403, %v2402
  %v2417 = vpack.c.b16 %v2405, %v2404
  %v2418 = vpack.c.b16 %v2407, %v2406
  %v2419 = vpack.c.b16 %v2409, %v2408
  %v2420 = vpack.c.b16 %v2411, %v2410
  %v2421 = vpack.c.b16 %v2413, %v2412
  %2430 = vmatpush.bf16.msra.mxu0 %v2421
  %2431 = vmatpush.bf16.msra.mxu0 %v2420
  %2432 = vmatpush.bf16.msra.mxu0 %v2419
  %2433 = vmatpush.bf16.msra.mxu0 %v2418
  %2434 = vmatpush.bf16.msra.mxu0 %v2417
  %2435 = vmatpush.bf16.msra.mxu0 %v2416
  %2436 = vmatpush.bf16.msra.mxu0 %v2415
  %2437 = vmatpush.bf16.msra.mxu0 %v2414
  %2438 = vmatmul.bf16.gmra.mxu0 %v2361
  %v2439 = vpop.f32.mrf.mxu0
  %v2440 = vadd.f32 %v2380, %v2439
  %v2441 = vpop.f32.mrf.mxu0
  %2442 = vdwg.mxu0
  %v2443 = vmax.f32 %v2440, 0.0
  %v2444 = vpack.c.bf16 %v2443, %v2443
  %v2445 = vld [vmem:[%s11] sm:$0xf]
  %v2446 = vld [vmem:[%s11 + $0x4] sm:$0xf]
  %v2447 = vld [vmem:[%s11 + $0x8] sm:$0xf]
  %v2448 = vld [vmem:[%s11 + $0xc] sm:$0xf]
  %v2449 = vld [vmem:[%s11 + $0x10] sm:$0xf]
  %v2450 = vld [vmem:[%s11 + $0x14] sm:$0xf]
  %v2451 = vld [vmem:[%s11 + $0x18] sm:$0xf]
  %v2452 = vld [vmem:[%s11 + $0x1c] sm:$0xf]
  %v2453 = vld [vmem:[%s11 + $0x20] sm:$0xf]
  %v2454 = vld [vmem:[%s11 + $0x24] sm:$0xf]
  %v2455 = vld [vmem:[%s11 + $0x28] sm:$0xf]
  %v2456 = vld [vmem:[%s11 + $0x2c] sm:$0xf]
  %v2457 = vld [vmem:[%s11 + $0x30] sm:$0xf]
  %v2458 = vld [vmem:[%s11 + $0x34] sm:$0xf]
  %v2459 = vld [vmem:[%s11 + $0x38] sm:$0xf]
  %v2460 = vld [vmem:[%s11 + $0x3c] sm:$0xf]
  %v2461 = vld [vmem:[%s12] sm:$0x1]
  %v2463 = vperm.slane %v2461, 0
  %v2481 = vunpack.c.l.b16 %v2445
  %v2482 = vunpack.c.l.b16 %v2446
  %v2483 = vunpack.c.l.b16 %v2447
  %v2484 = vunpack.c.l.b16 %v2448
  %v2485 = vunpack.c.l.b16 %v2449
  %v2486 = vunpack.c.l.b16 %v2450
  %v2487 = vunpack.c.l.b16 %v2451
  %v2488 = vunpack.c.l.b16 %v2452
  %v2489 = vunpack.c.l.b16 %v2453
  %v2490 = vunpack.c.l.b16 %v2454
  %v2491 = vunpack.c.l.b16 %v2455
  %v2492 = vunpack.c.l.b16 %v2456
  %v2493 = vunpack.c.l.b16 %v2457
  %v2494 = vunpack.c.l.b16 %v2458
  %v2495 = vunpack.c.l.b16 %v2459
  %v2496 = vunpack.c.l.b16 %v2460
  %v2497 = vpack.c.b16 %v2482, %v2481
  %v2498 = vpack.c.b16 %v2484, %v2483
  %v2499 = vpack.c.b16 %v2486, %v2485
  %v2500 = vpack.c.b16 %v2488, %v2487
  %v2501 = vpack.c.b16 %v2490, %v2489
  %v2502 = vpack.c.b16 %v2492, %v2491
  %v2503 = vpack.c.b16 %v2494, %v2493
  %v2504 = vpack.c.b16 %v2496, %v2495
  %2513 = vmatpush.bf16.msra.mxu0 %v2504
  %2514 = vmatpush.bf16.msra.mxu0 %v2503
  %2515 = vmatpush.bf16.msra.mxu0 %v2502
  %2516 = vmatpush.bf16.msra.mxu0 %v2501
  %2517 = vmatpush.bf16.msra.mxu0 %v2500
  %2518 = vmatpush.bf16.msra.mxu0 %v2499
  %2519 = vmatpush.bf16.msra.mxu0 %v2498
  %2520 = vmatpush.bf16.msra.mxu0 %v2497
  %2521 = vmatmul.bf16.gmra.mxu0 %v2444
  %v2522 = vpop.f32.mrf.mxu0
  %v2523 = vadd.f32 %v2463, %v2522
  %v2524 = vpop.f32.mrf.mxu0
  %2525 = vdwg.mxu0
  %v2526 = vlaneseq
  %v2527 = vand.u32 %v2526, 127
  %vm2528 = vcmp.lt.s32.totalorder %v2527, 10
  %v2529 = vsel %vm2528, %v2523, -1e+30
  %2530 = vmax.xlane.f32.xlu0 %v2529
  %v2531 = vpop.xlane.xlu0 %2530
  %v2532 = vsub.f32 %v2529, %v2531
  %v2533 = vmul.f32 %v2532, 1.442695
  %v2534 = vpow.pop %v2533
  %2535 = vadd.xlane.f32.xlu0 %v2534
  %v2536 = vpop.xlane.xlu0 %2535
  %v2537 = vlog2.pop %v2536
  %v2538 = vmul.f32 %v2537, 0.6931472
  %v2539 = vsub.f32 %v2532, %v2538
  %v2540 = vpack.c.bf16 %v2539, %v2539
  %2541 = vst [vmem:[%s13] sm:$0xf] %v2540
  // Predicated region
  $region54: #{net_forward.1} parent=0 // pred_check
    _
  $region55: #{net_forward.1} parent=0 // pred_check_branch
    %2543 = sbr.rel (0) target = $region57
  $region56: #{net_forward.1} parent=0 // pred_region
    _
  $region57: #{net_forward.1} parent=0 // pred_fallthru
    _
  // Predicated region
  $region58: #{net_forward.1} parent=0 // pred_check
    _
  $region59: #{net_forward.1} parent=0 // pred_check_branch
    %2545 = sbr.rel (0) target = $region61
  $region60: #{net_forward.1} parent=0 // pred_region
    _
  $region61: #{net_forward.1} parent=0 // pred_fallthru
    _

</llo_original>
